<compile_context>
chip_gen: v5e
topology: v5e:2x2
jax: 0.10.0
libtpu: 0.0.40
codegen_flags: <defaults>
</compile_context>

<pallas_src>
import functools
import math

import jax
import jax.numpy as jnp
from jax.experimental import pallas as pl
from jax.experimental.pallas import tpu as pltpu


# Row indices inside the packed (15, E) bias / LayerNorm slab.
_SA_QB, _SA_KB, _SA_VB, _SA_OB = 0, 1, 2, 3
_CA_QB, _CA_KB, _CA_VB, _CA_OB = 4, 5, 6, 7
_FF2_B = 8
_LN1_G, _LN1_B, _LN2_G, _LN2_B, _LN3_G, _LN3_B = 9, 10, 11, 12, 13, 14
_NUM_VEC_ROWS = 15


# ------------------------------ in-kernel helpers ----------------------------

def _add_layernorm(x, r, g, b, eps):
    y = x + r
    mu = jnp.mean(y, axis=-1, keepdims=True)
    var = jnp.mean((y - mu) ** 2, axis=-1, keepdims=True)
    return (y - mu) * jax.lax.rsqrt(var + eps) * g + b


def _attn_heads(q, k, v, heads_ref, nhead, dh):
    """q: (Lq, E) f32 (already scaled), k/v: (Lk, E) f32.  Writes the concatenated
    per-head attention outputs into heads_ref (Lq, E) bf16 so the output projection
    is ONE dense (Lq,E)x(E,E) MXU matmul afterwards."""
    for h in range(nhead):                      # small static unroll (nhead = E // 64)
        sl = slice(h * dh, (h + 1) * dh)
        qh = q[:, sl].astype(jnp.bfloat16)
        kh = k[:, sl].astype(jnp.bfloat16)
        vh = v[:, sl].astype(jnp.bfloat16)
        s = jax.lax.dot_general(qh, kh, (((1,), (1,)), ((), ())),
                                preferred_element_type=jnp.float32)      # (Lq, Lk)
        s = s - jnp.max(s, axis=-1, keepdims=True)
        p = jnp.exp(s)
        p = p * pl.reciprocal(jnp.sum(p, axis=-1, keepdims=True), approx=True)
        oh = jnp.dot(p.astype(jnp.bfloat16), vh, preferred_element_type=jnp.float32)
        heads_ref[:, sl] = oh.astype(heads_ref.dtype)


# ------------------------- fused multi-layer decoder kernel ------------------

def _i2t_kernel(
    x_ref, qry_ref, proj_w_ref, proj_b_ref,
    sa_qkv_w_ref, sa_out_w_ref,
    ca_q_w_ref, ca_kv_w_ref, ca_out_w_ref,
    ff1_w_ref, ff2_w_ref, vec_ref, ff1_b_ref,
    o_ref,
    mem_ref, tgt_ref, heads_ref,
    *, nhead, eps):
    layer = pl.program_id(1)
    E = qry_ref.shape[-1]
    dh = E // nhead
    scale = 1.0 / math.sqrt(dh)

    # ---- layer 0: project the image features (memory) once, load the query ----
    @pl.when(layer == 0)
    def _():
        xb = x_ref[0].astype(jnp.bfloat16)                               # (S, Dv)
        mem_ref[...] = (jnp.dot(xb, proj_w_ref[...],
                                preferred_element_type=jnp.float32)
                        + proj_b_ref[...])
        tgt_ref[...] = qry_ref[0].astype(jnp.float32)

    vec = vec_ref[0]                                                     # (15, E) f32

    def row(i):
        return vec[i:i + 1, :]                                           # (1, E)

    x = tgt_ref[...]                                                     # (L, E) f32
    m = mem_ref[...]                                                     # (S, E) f32
    mb = m.astype(jnp.bfloat16)

    # ---- self-attention: fused (L,E)x(E,3E) QKV projection ----
    qkv = jnp.dot(x.astype(jnp.bfloat16), sa_qkv_w_ref[0],
                  preferred_element_type=jnp.float32)                    # (L, 3E)
    q = (qkv[:, :E] + row(_SA_QB)) * scale
    k = qkv[:, E:2 * E] + row(_SA_KB)
    v = qkv[:, 2 * E:] + row(_SA_VB)
    _attn_heads(q, k, v, heads_ref, nhead, dh)
    sa = (jnp.dot(heads_ref[...], sa_out_w_ref[0],
                  preferred_element_type=jnp.float32) + row(_SA_OB))
    x = _add_layernorm(x, sa, row(_LN1_G), row(_LN1_B), eps)

    # ---- cross-attention: q from tgt, fused (S,E)x(E,2E) K/V from memory ----
    q = (jnp.dot(x.astype(jnp.bfloat16), ca_q_w_ref[0],
                 preferred_element_type=jnp.float32) + row(_CA_QB)) * scale
    kv = jnp.dot(mb, ca_kv_w_ref[0], preferred_element_type=jnp.float32)
    k = kv[:, :E] + row(_CA_KB)
    v = kv[:, E:] + row(_CA_VB)
    _attn_heads(q, k, v, heads_ref, nhead, dh)
    ca = (jnp.dot(heads_ref[...], ca_out_w_ref[0],
                  preferred_element_type=jnp.float32) + row(_CA_OB))
    x = _add_layernorm(x, ca, row(_LN2_G), row(_LN2_B), eps)

    # ---- feed-forward (ReLU); the (L, d_ff) intermediate never leaves VMEM ----
    h = jnp.maximum(
        jnp.dot(x.astype(jnp.bfloat16), ff1_w_ref[0],
                preferred_element_type=jnp.float32) + ff1_b_ref[0], 0.0)
    f = (jnp.dot(h.astype(jnp.bfloat16), ff2_w_ref[0],
                 preferred_element_type=jnp.float32) + row(_FF2_B))
    x = _add_layernorm(x, f, row(_LN3_G), row(_LN3_B), eps)

    tgt_ref[...] = x                                                     # carry to next layer

    @pl.when(layer == pl.num_programs(1) - 1)
    def _():
        o_ref[0] = x.astype(o_ref.dtype)


def i2t_fused(x, p, nhead, eps=1e-5):
    """x: (B, S, Dv) image features.  Returns (B, L, E).  One fused pallas_call for
    visual projection + all decoder layers; weights are stacked on a leading layer axis
    and streamed (double-buffered) across the 'arbitrary' layer grid axis."""
    B, S, Dv = x.shape
    NL = p["sa_qkv_w"].shape[0]
    _, L, E = p["query"].shape
    F = p["ff1_w"].shape[2]

    per_b = lambda b, l: (b, 0, 0)
    per_l = lambda b, l: (l, 0, 0)
    const3 = lambda b, l: (0, 0, 0)
    const2 = lambda b, l: (0, 0)

    in_specs = [
        pl.BlockSpec((1, S, Dv), per_b),                  # x (per batch, layer-invariant)
        pl.BlockSpec((1, L, E), const3),                  # query (broadcast over batch)
        pl.BlockSpec((Dv, E), const2),                    # proj_w (bf16, grid-invariant)
        pl.BlockSpec((1, E), const2),                     # proj_b
        pl.BlockSpec((1, E, 3 * E), per_l),               # sa_qkv_w (bf16)
        pl.BlockSpec((1, E, E), per_l),                   # sa_out_w (bf16)
        pl.BlockSpec((1, E, E), per_l),                   # ca_q_w   (bf16)
        pl.BlockSpec((1, E, 2 * E), per_l),               # ca_kv_w  (bf16)
        pl.BlockSpec((1, E, E), per_l),                   # ca_out_w (bf16)
        pl.BlockSpec((1, E, F), per_l),                   # ff1_w    (bf16)
        pl.BlockSpec((1, F, E), per_l),                   # ff2_w    (bf16)
        pl.BlockSpec((1, _NUM_VEC_ROWS, E), per_l),       # packed biases + LN params (f32)
        pl.BlockSpec((1, 1, F), per_l),                   # ff1_b (f32)
    ]
    operands = (x, p["query"], p["proj_w"], p["proj_b"],
                p["sa_qkv_w"], p["sa_out_w"], p["ca_q_w"], p["ca_kv_w"],
                p["ca_out_w"], p["ff1_w"], p["ff2_w"], p["vec_e"], p["ff1_b"])

    # Explicit VMEM budget: 2x (double-buffered) input blocks + output block + scratch
    # + headroom, clamped to [32 MiB default, 64 MiB v7x physical VMEM].
    blk_bytes = sum(math.prod(spec.block_shape) * jnp.dtype(op.dtype).itemsize
                    for spec, op in zip(in_specs, operands))
    blk_bytes += L * E * jnp.dtype(x.dtype).itemsize
    scratch_bytes = (S * E + L * E) * 4 + L * E * 2
    vmem_limit = int(min(64 * 1024 * 1024,
                         max(32 * 1024 * 1024,
                             2 * blk_bytes + scratch_bytes + (4 << 20))))

    kernel = functools.partial(_i2t_kernel, nhead=nhead, eps=eps)
    return pl.pallas_call(
        kernel,
        out_shape=jax.ShapeDtypeStruct((B, L, E), x.dtype),
        grid=(B, NL),
        in_specs=in_specs,
        out_specs=pl.BlockSpec((1, L, E), per_b),
        scratch_shapes=[
            pltpu.VMEM((S, E), jnp.float32),      # projected memory (resident per batch)
            pltpu.VMEM((L, E), jnp.float32),      # tgt, carried across the layer axis
            pltpu.VMEM((L, E), jnp.bfloat16),     # concatenated attention-head outputs
        ],
        compiler_params=pltpu.CompilerParams(
            dimension_semantics=("parallel", "arbitrary"),
            vmem_limit_bytes=vmem_limit),
    )(*operands)


# ------------------- standalone visual projection (num_layers == 0) ----------

def _visual_proj_kernel(x_ref, w_ref, b_ref, o_ref):
    o_ref[...] = (jnp.dot(x_ref[...].astype(jnp.bfloat16), w_ref[...],
                          preferred_element_type=jnp.float32)
                  + b_ref[...]).astype(o_ref.dtype)


def visual_proj(x, w, b):
    """Single-block (B*S, Dv) x (Dv, E) projection — one grid step, no batch loop."""
    B, S, Dv = x.shape
    E = w.shape[1]
    y = pl.pallas_call(
        _visual_proj_kernel,
        out_shape=jax.ShapeDtypeStruct((B * S, E), x.dtype),
    )(x.reshape(B * S, Dv), w, b)
    return y.reshape(B, S, E)


# --------------------------------- forward -----------------------------------

def image2token_forward(x, packed, nhead, eps=1e-5):
    """x: (b, s, visual_hidden) -> (b, max_length, text_hidden)."""
    if packed["num_layers"] == 0:
        return visual_proj(x, packed["proj_w"], packed["proj_b"])
    return i2t_fused(x, packed, nhead, eps=eps)


# ------------------------------- param helpers --------------------------------
# init_torch_params builds PyTorch-layout tensors (nn.Linear: (out, in); MHA in_proj: (3E, E)).
# pack_params converts ONCE (outside the hot path) into the fused kernel layout:
# bf16 weights as (in, out) stacked over layers, biases/LN params packed into a (15, E) slab.

def init_torch_params(key, visual_hidden, text_hidden, max_length, num_layers, d_ff):
    def nrm(k, shape, scale=0.02):
        return jax.random.normal(k, shape, jnp.float32) * scale

    keys = iter(jax.random.split(key, 4 + max(num_layers, 1) * 12))
    E = text_hidden

    def mha_params():
        return {
            "in_w": nrm(next(keys), (3 * E, E)),
            "in_b": nrm(next(keys), (3 * E,)),
            "out_w": nrm(next(keys), (E, E)),
            "out_b": nrm(next(keys), (E,)),
        }

    layers = []
    for _ in range(num_layers):
        layers.append({
            "self_attn": mha_params(),
            "cross_attn": mha_params(),
            "ff1_w": nrm(next(keys), (d_ff, E)),
            "ff1_b": nrm(next(keys), (d_ff,)),
            "ff2_w": nrm(next(keys), (E, d_ff)),
            "ff2_b": nrm(next(keys), (E,)),
            "ln1_g": jnp.ones((E,), jnp.float32), "ln1_b": jnp.zeros((E,), jnp.float32),
            "ln2_g": jnp.ones((E,), jnp.float32), "ln2_b": jnp.zeros((E,), jnp.float32),
            "ln3_g": jnp.ones((E,), jnp.float32), "ln3_b": jnp.zeros((E,), jnp.float32),
        })

    return {
        "proj_w": nrm(next(keys), (E, visual_hidden)),
        "proj_b": nrm(next(keys), (E,)),
        "query": nrm(next(keys), (1, max_length, E), scale=1.0),  # torch.randn-like
        "layers": layers,
    }


def pack_params(tp):
    E = tp["proj_w"].shape[0]
    num_layers = len(tp["layers"])

    def bf(w_out_in):                      # torch (out, in) -> kernel (in, out) bf16
        return jnp.asarray(w_out_in.T, jnp.bfloat16)

    packed = {
        "proj_w": jnp.asarray(tp["proj_w"].T, jnp.bfloat16),   # (Dv, E)
        "proj_b": tp["proj_b"].reshape(1, -1).astype(jnp.float32),
        "query": tp["query"].astype(jnp.float32),              # (1, L, E)
        "num_layers": num_layers,
    }
    if num_layers == 0:
        return packed

    sa_qkv_w, sa_out_w = [], []
    ca_q_w, ca_kv_w, ca_out_w = [], [], []
    ff1_w, ff2_w, vec_e, ff1_b = [], [], [], []
    for lp in tp["layers"]:
        sa, ca = lp["self_attn"], lp["cross_attn"]
        sa_qkv_w.append(bf(sa["in_w"]))                 # (E, 3E)
        sa_out_w.append(bf(sa["out_w"]))                # (E, E)
        ca_q_w.append(bf(ca["in_w"][:E]))               # (E, E)
        ca_kv_w.append(bf(ca["in_w"][E:]))              # (E, 2E)
        ca_out_w.append(bf(ca["out_w"]))                # (E, E)
        ff1_w.append(bf(lp["ff1_w"]))                   # (E, F)
        ff2_w.append(bf(lp["ff2_w"]))                   # (F, E)
        sab, cab = sa["in_b"], ca["in_b"]
        vec_e.append(jnp.stack([
            sab[:E], sab[E:2 * E], sab[2 * E:],         # 0..2  self-attn q/k/v bias
            sa["out_b"],                                # 3     self-attn out bias
            cab[:E], cab[E:2 * E], cab[2 * E:],         # 4..6  cross-attn q/k/v bias
            ca["out_b"],                                # 7     cross-attn out bias
            lp["ff2_b"],                                # 8     ff2 bias
            lp["ln1_g"], lp["ln1_b"],                   # 9,10
            lp["ln2_g"], lp["ln2_b"],                   # 11,12
            lp["ln3_g"], lp["ln3_b"],                   # 13,14
        ], axis=0).astype(jnp.float32))                 # (15, E)
        ff1_b.append(lp["ff1_b"].reshape(1, -1).astype(jnp.float32))   # (1, F)

    packed.update(
        sa_qkv_w=jnp.stack(sa_qkv_w), sa_out_w=jnp.stack(sa_out_w),
        ca_q_w=jnp.stack(ca_q_w), ca_kv_w=jnp.stack(ca_kv_w),
        ca_out_w=jnp.stack(ca_out_w),
        ff1_w=jnp.stack(ff1_w), ff2_w=jnp.stack(ff2_w),
        vec_e=jnp.stack(vec_e), ff1_b=jnp.stack(ff1_b))
    return packed


# ----------------------------------- main ------------------------------------

if __name__ == "__main__":
    # Small, module-consistent shapes: text_hidden must be a multiple of 64 so nhead >= 1.
    B, S = 2, 16
    VISUAL_HIDDEN = 128
    TEXT_HIDDEN = 128
    MAX_LENGTH = 16
    NUM_LAYERS = 2
    D_FF = 256
    NHEAD = TEXT_HIDDEN // 64  # = 2

    key = jax.random.PRNGKey(0)
    kx, kp = jax.random.split(key)
    x = jax.random.normal(kx, (B, S, VISUAL_HIDDEN), jnp.float32)

    torch_params = init_torch_params(kp, VISUAL_HIDDEN, TEXT_HIDDEN, MAX_LENGTH,
                                     NUM_LAYERS, D_FF)
    packed = pack_params(torch_params)        # one-time layout/bf16 conversion (not hot path)

    out = image2token_forward(x, packed, NHEAD)
    out = jax.block_until_ready(out)
    assert out.shape == (B, MAX_LENGTH, TEXT_HIDDEN)
    assert bool(jnp.all(jnp.isfinite(out)))
    print("KERNEL_OK")
</pallas_src>

<mosaic_0001>
module attributes {stable_mosaic.version = 11 : i64} {
  func.func @_i2t_kernel(%arg0: i32, %arg1: i32, %arg2: memref<1x16x128xf32, #tpu.memory_space<vmem>>, %arg3: memref<1x16x128xf32, #tpu.memory_space<vmem>>, %arg4: memref<128x128xbf16, #tpu.memory_space<vmem>>, %arg5: memref<1x128xf32, #tpu.memory_space<vmem>>, %arg6: memref<1x128x384xbf16, #tpu.memory_space<vmem>>, %arg7: memref<1x128x128xbf16, #tpu.memory_space<vmem>>, %arg8: memref<1x128x128xbf16, #tpu.memory_space<vmem>>, %arg9: memref<1x128x256xbf16, #tpu.memory_space<vmem>>, %arg10: memref<1x128x128xbf16, #tpu.memory_space<vmem>>, %arg11: memref<1x128x256xbf16, #tpu.memory_space<vmem>>, %arg12: memref<1x256x128xbf16, #tpu.memory_space<vmem>>, %arg13: memref<1x15x128xf32, #tpu.memory_space<vmem>>, %arg14: memref<1x1x256xf32, #tpu.memory_space<vmem>>, %arg15: memref<1x16x128xf32, #tpu.memory_space<vmem>>, %arg16: memref<16x128xf32, #tpu.memory_space<vmem>>, %arg17: memref<16x128xf32, #tpu.memory_space<vmem>>, %arg18: memref<16x128xbf16, #tpu.memory_space<vmem>>) attributes {dimension_semantics = [#tpu.dimension_semantics<parallel>, #tpu.dimension_semantics<arbitrary>], iteration_bounds = array<i64: 2, 2>, scalar_prefetch = 0 : i64, scratch_operands = 3 : i64, tpu.core_type = #tpu.core_type<tc>, window_params = [{transform_indices = @transform_0, window_bounds = array<i64: 1, 16, 128>}, {pipeline_mode = #tpu.pipeline_mode<synchronous>, transform_indices = @transform_1, window_bounds = array<i64: 1, 16, 128>}, {pipeline_mode = #tpu.pipeline_mode<synchronous>, transform_indices = @transform_2, window_bounds = array<i64: 128, 128>}, {pipeline_mode = #tpu.pipeline_mode<synchronous>, transform_indices = @transform_3, window_bounds = array<i64: 1, 128>}, {transform_indices = @transform_4, window_bounds = array<i64: 1, 128, 384>}, {transform_indices = @transform_5, window_bounds = array<i64: 1, 128, 128>}, {transform_indices = @transform_6, window_bounds = array<i64: 1, 128, 128>}, {transform_indices = @transform_7, window_bounds = array<i64: 1, 128, 256>}, {transform_indices = @transform_8, window_bounds = array<i64: 1, 128, 128>}, {transform_indices = @transform_9, window_bounds = array<i64: 1, 128, 256>}, {transform_indices = @transform_10, window_bounds = array<i64: 1, 256, 128>}, {transform_indices = @transform_11, window_bounds = array<i64: 1, 15, 128>}, {transform_indices = @transform_12, window_bounds = array<i64: 1, 1, 256>}, {transform_indices = @transform_13, window_bounds = array<i64: 1, 16, 128>}]} {
    %c0_i32 = arith.constant 0 : i32
    %0 = arith.cmpi eq, %arg1, %c0_i32 : i32
    %1 = arith.extui %0 : i1 to i32
    %c0_i32_0 = arith.constant 0 : i32
    %2 = arith.cmpi ne, %1, %c0_i32_0 : i32
    scf.if %2 {
      %c0_85 = arith.constant 0 : index
      %c0_86 = arith.constant 0 : index
      %c0_87 = arith.constant 0 : index
      %240 = vector.load %arg2[%c0_85, %c0_86, %c0_87] : memref<1x16x128xf32, #tpu.memory_space<vmem>>, vector<1x16x128xf32>
      %241 = vector.shape_cast %240 : vector<1x16x128xf32> to vector<16x128xf32>
      %242 = arith.truncf %241 : vector<16x128xf32> to vector<16x128xbf16>
      %c0_88 = arith.constant 0 : index
      %c0_89 = arith.constant 0 : index
      %243 = vector.load %arg4[%c0_88, %c0_89] : memref<128x128xbf16, #tpu.memory_space<vmem>>, vector<128x128xbf16>
      %cst_90 = arith.constant dense<0.000000e+00> : vector<16x128xf32>
      %244 = tpu.matmul %242, %243, %cst_90 {dimension_numbers = #tpu.dot_dimension_numbers<[1], [0], [0], [1], [0, 0, 1, 1], [], []>} : vector<16x128xbf16>, vector<128x128xbf16>, vector<16x128xf32> -> vector<16x128xf32>
      %c0_91 = arith.constant 0 : index
      %c0_92 = arith.constant 0 : index
      %245 = vector.load %arg5[%c0_91, %c0_92] : memref<1x128xf32, #tpu.memory_space<vmem>>, vector<1x128xf32>
      %246 = vector.broadcast %245 : vector<1x128xf32> to vector<16x128xf32>
      %247 = arith.addf %244, %246 : vector<16x128xf32>
      %c0_93 = arith.constant 0 : index
      %c0_94 = arith.constant 0 : index
      %248 = vector.load %arg16[%c0_93, %c0_94] : memref<16x128xf32, #tpu.memory_space<vmem>>, vector<16x128xf32>
      tpu.vector_store %arg16[%c0_93, %c0_94], %247 {strides = array<i32>} : memref<16x128xf32, #tpu.memory_space<vmem>>, vector<16x128xf32>,
      %c0_95 = arith.constant 0 : index
      %c0_96 = arith.constant 0 : index
      %c0_97 = arith.constant 0 : index
      %249 = vector.load %arg3[%c0_95, %c0_96, %c0_97] : memref<1x16x128xf32, #tpu.memory_space<vmem>>, vector<1x16x128xf32>
      %250 = vector.shape_cast %249 : vector<1x16x128xf32> to vector<16x128xf32>
      %c0_98 = arith.constant 0 : index
      %c0_99 = arith.constant 0 : index
      %251 = vector.load %arg17[%c0_98, %c0_99] : memref<16x128xf32, #tpu.memory_space<vmem>>, vector<16x128xf32>
      tpu.vector_store %arg17[%c0_98, %c0_99], %250 {strides = array<i32>} : memref<16x128xf32, #tpu.memory_space<vmem>>, vector<16x128xf32>,
    } else {
    }
    %c0 = arith.constant 0 : index
    %c0_1 = arith.constant 0 : index
    %c0_2 = arith.constant 0 : index
    %3 = vector.load %arg13[%c0, %c0_1, %c0_2] : memref<1x15x128xf32, #tpu.memory_space<vmem>>, vector<1x15x128xf32>
    %4 = vector.shape_cast %3 : vector<1x15x128xf32> to vector<15x128xf32>
    %c0_3 = arith.constant 0 : index
    %c0_4 = arith.constant 0 : index
    %5 = vector.load %arg17[%c0_3, %c0_4] : memref<16x128xf32, #tpu.memory_space<vmem>>, vector<16x128xf32>
    %c0_5 = arith.constant 0 : index
    %c0_6 = arith.constant 0 : index
    %6 = vector.load %arg16[%c0_5, %c0_6] : memref<16x128xf32, #tpu.memory_space<vmem>>, vector<16x128xf32>
    %7 = arith.truncf %6 : vector<16x128xf32> to vector<16x128xbf16>
    %8 = arith.truncf %5 : vector<16x128xf32> to vector<16x128xbf16>
    %c0_7 = arith.constant 0 : index
    %c0_8 = arith.constant 0 : index
    %c0_9 = arith.constant 0 : index
    %9 = vector.load %arg6[%c0_7, %c0_8, %c0_9] : memref<1x128x384xbf16, #tpu.memory_space<vmem>>, vector<1x128x384xbf16>
    %10 = vector.shape_cast %9 : vector<1x128x384xbf16> to vector<128x384xbf16>
    %cst = arith.constant dense<0.000000e+00> : vector<16x384xf32>
    %11 = tpu.matmul %8, %10, %cst {dimension_numbers = #tpu.dot_dimension_numbers<[1], [0], [0], [1], [0, 0, 1, 1], [], []>} : vector<16x128xbf16>, vector<128x384xbf16>, vector<16x384xf32> -> vector<16x384xf32>
    %12 = vector.extract_strided_slice %11 {offsets = [0, 0], sizes = [16, 128], strides = [1, 1]} : vector<16x384xf32> to vector<16x128xf32>
    %13 = vector.extract_strided_slice %4 {offsets = [0, 0], sizes = [1, 128], strides = [1, 1]} : vector<15x128xf32> to vector<1x128xf32>
    %14 = vector.broadcast %13 : vector<1x128xf32> to vector<16x128xf32>
    %15 = arith.addf %12, %14 : vector<16x128xf32>
    %cst_10 = arith.constant 1.250000e-01 : f32
    %16 = vector.broadcast %cst_10 : f32 to vector<16x128xf32>
    %17 = arith.mulf %15, %16 : vector<16x128xf32>
    %18 = vector.extract_strided_slice %11 {offsets = [0, 128], sizes = [16, 128], strides = [1, 1]} : vector<16x384xf32> to vector<16x128xf32>
    %19 = vector.extract_strided_slice %4 {offsets = [1, 0], sizes = [1, 128], strides = [1, 1]} : vector<15x128xf32> to vector<1x128xf32>
    %20 = vector.broadcast %19 : vector<1x128xf32> to vector<16x128xf32>
    %21 = arith.addf %18, %20 : vector<16x128xf32>
    %22 = vector.extract_strided_slice %11 {offsets = [0, 256], sizes = [16, 128], strides = [1, 1]} : vector<16x384xf32> to vector<16x128xf32>
    %23 = vector.extract_strided_slice %4 {offsets = [2, 0], sizes = [1, 128], strides = [1, 1]} : vector<15x128xf32> to vector<1x128xf32>
    %24 = vector.broadcast %23 : vector<1x128xf32> to vector<16x128xf32>
    %25 = arith.addf %22, %24 : vector<16x128xf32>
    %26 = vector.extract_strided_slice %17 {offsets = [0, 0], sizes = [16, 64], strides = [1, 1]} : vector<16x128xf32> to vector<16x64xf32>
    %27 = arith.truncf %26 : vector<16x64xf32> to vector<16x64xbf16>
    %28 = vector.extract_strided_slice %21 {offsets = [0, 0], sizes = [16, 64], strides = [1, 1]} : vector<16x128xf32> to vector<16x64xf32>
    %29 = arith.truncf %28 : vector<16x64xf32> to vector<16x64xbf16>
    %30 = vector.extract_strided_slice %25 {offsets = [0, 0], sizes = [16, 64], strides = [1, 1]} : vector<16x128xf32> to vector<16x64xf32>
    %31 = arith.truncf %30 : vector<16x64xf32> to vector<16x64xbf16>
    %cst_11 = arith.constant dense<0.000000e+00> : vector<16x16xf32>
    %32 = tpu.matmul %27, %29, %cst_11 {dimension_numbers = #tpu.dot_dimension_numbers<[1], [1], [0], [0], [0, 0, 1, 0], [], []>} : vector<16x64xbf16>, vector<16x64xbf16>, vector<16x16xf32> -> vector<16x16xf32>
    %cst_12 = arith.constant dense<0xFF800000> : vector<16xf32>
    %33 = vector.multi_reduction <maximumf>, %32, %cst_12 [1] : vector<16x16xf32> to vector<16xf32>
    %34 = vector.shape_cast %33 : vector<16xf32> to vector<16x1xf32>
    %35 = vector.broadcast %34 : vector<16x1xf32> to vector<16x16xf32>
    %36 = arith.subf %32, %35 : vector<16x16xf32>
    %37 = math.exp %36 : vector<16x16xf32>
    %cst_13 = arith.constant dense<0.000000e+00> : vector<16xf32>
    %38 = vector.multi_reduction <add>, %37, %cst_13 [1] : vector<16x16xf32> to vector<16xf32>
    %39 = vector.shape_cast %38 : vector<16xf32> to vector<16x1xf32>
    %40 = tpu.reciprocal %39 {approx = true} : vector<16x1xf32> -> vector<16x1xf32>
    %41 = vector.broadcast %40 : vector<16x1xf32> to vector<16x16xf32>
    %42 = arith.mulf %37, %41 : vector<16x16xf32>
    %43 = arith.truncf %42 : vector<16x16xf32> to vector<16x16xbf16>
    %cst_14 = arith.constant dense<0.000000e+00> : vector<16x64xf32>
    %44 = tpu.matmul %43, %31, %cst_14 {dimension_numbers = #tpu.dot_dimension_numbers<[1], [0], [0], [1], [0, 0, 1, 1], [], []>} : vector<16x16xbf16>, vector<16x64xbf16>, vector<16x64xf32> -> vector<16x64xf32>
    %45 = arith.truncf %44 : vector<16x64xf32> to vector<16x64xbf16>
    %c0_15 = arith.constant 0 : index
    %c0_16 = arith.constant 0 : index
    %46 = vector.load %arg18[%c0_15, %c0_16] : memref<16x128xbf16, #tpu.memory_space<vmem>>, vector<16x64xbf16>
    tpu.vector_store %arg18[%c0_15, %c0_16], %45 {strides = array<i32>} : memref<16x128xbf16, #tpu.memory_space<vmem>>, vector<16x64xbf16>,
    %47 = vector.extract_strided_slice %17 {offsets = [0, 64], sizes = [16, 64], strides = [1, 1]} : vector<16x128xf32> to vector<16x64xf32>
    %48 = arith.truncf %47 : vector<16x64xf32> to vector<16x64xbf16>
    %49 = vector.extract_strided_slice %21 {offsets = [0, 64], sizes = [16, 64], strides = [1, 1]} : vector<16x128xf32> to vector<16x64xf32>
    %50 = arith.truncf %49 : vector<16x64xf32> to vector<16x64xbf16>
    %51 = vector.extract_strided_slice %25 {offsets = [0, 64], sizes = [16, 64], strides = [1, 1]} : vector<16x128xf32> to vector<16x64xf32>
    %52 = arith.truncf %51 : vector<16x64xf32> to vector<16x64xbf16>
    %cst_17 = arith.constant dense<0.000000e+00> : vector<16x16xf32>
    %53 = tpu.matmul %48, %50, %cst_17 {dimension_numbers = #tpu.dot_dimension_numbers<[1], [1], [0], [0], [0, 0, 1, 0], [], []>} : vector<16x64xbf16>, vector<16x64xbf16>, vector<16x16xf32> -> vector<16x16xf32>
    %cst_18 = arith.constant dense<0xFF800000> : vector<16xf32>
    %54 = vector.multi_reduction <maximumf>, %53, %cst_18 [1] : vector<16x16xf32> to vector<16xf32>
    %55 = vector.shape_cast %54 : vector<16xf32> to vector<16x1xf32>
    %56 = vector.broadcast %55 : vector<16x1xf32> to vector<16x16xf32>
    %57 = arith.subf %53, %56 : vector<16x16xf32>
    %58 = math.exp %57 : vector<16x16xf32>
    %cst_19 = arith.constant dense<0.000000e+00> : vector<16xf32>
    %59 = vector.multi_reduction <add>, %58, %cst_19 [1] : vector<16x16xf32> to vector<16xf32>
    %60 = vector.shape_cast %59 : vector<16xf32> to vector<16x1xf32>
    %61 = tpu.reciprocal %60 {approx = true} : vector<16x1xf32> -> vector<16x1xf32>
    %62 = vector.broadcast %61 : vector<16x1xf32> to vector<16x16xf32>
    %63 = arith.mulf %58, %62 : vector<16x16xf32>
    %64 = arith.truncf %63 : vector<16x16xf32> to vector<16x16xbf16>
    %cst_20 = arith.constant dense<0.000000e+00> : vector<16x64xf32>
    %65 = tpu.matmul %64, %52, %cst_20 {dimension_numbers = #tpu.dot_dimension_numbers<[1], [0], [0], [1], [0, 0, 1, 1], [], []>} : vector<16x16xbf16>, vector<16x64xbf16>, vector<16x64xf32> -> vector<16x64xf32>
    %66 = arith.truncf %65 : vector<16x64xf32> to vector<16x64xbf16>
    %c0_21 = arith.constant 0 : index
    %c64 = arith.constant 64 : index
    %67 = vector.load %arg18[%c0_21, %c64] : memref<16x128xbf16, #tpu.memory_space<vmem>>, vector<16x64xbf16>
    tpu.vector_store %arg18[%c0_21, %c64], %66 {strides = array<i32>} : memref<16x128xbf16, #tpu.memory_space<vmem>>, vector<16x64xbf16>,
    %c0_22 = arith.constant 0 : index
    %c0_23 = arith.constant 0 : index
    %68 = vector.load %arg18[%c0_22, %c0_23] : memref<16x128xbf16, #tpu.memory_space<vmem>>, vector<16x128xbf16>
    %c0_24 = arith.constant 0 : index
    %c0_25 = arith.constant 0 : index
    %c0_26 = arith.constant 0 : index
    %69 = vector.load %arg7[%c0_24, %c0_25, %c0_26] : memref<1x128x128xbf16, #tpu.memory_space<vmem>>, vector<1x128x128xbf16>
    %70 = vector.shape_cast %69 : vector<1x128x128xbf16> to vector<128x128xbf16>
    %cst_27 = arith.constant dense<0.000000e+00> : vector<16x128xf32>
    %71 = tpu.matmul %68, %70, %cst_27 {dimension_numbers = #tpu.dot_dimension_numbers<[1], [0], [0], [1], [0, 0, 1, 1], [], []>} : vector<16x128xbf16>, vector<128x128xbf16>, vector<16x128xf32> -> vector<16x128xf32>
    %72 = vector.extract_strided_slice %4 {offsets = [3, 0], sizes = [1, 128], strides = [1, 1]} : vector<15x128xf32> to vector<1x128xf32>
    %73 = vector.broadcast %72 : vector<1x128xf32> to vector<16x128xf32>
    %74 = arith.addf %71, %73 : vector<16x128xf32>
    %75 = vector.extract_strided_slice %4 {offsets = [9, 0], sizes = [1, 128], strides = [1, 1]} : vector<15x128xf32> to vector<1x128xf32>
    %76 = vector.extract_strided_slice %4 {offsets = [10, 0], sizes = [1, 128], strides = [1, 1]} : vector<15x128xf32> to vector<1x128xf32>
    %77 = arith.addf %5, %74 : vector<16x128xf32>
    %cst_28 = arith.constant dense<0.000000e+00> : vector<16xf32>
    %78 = vector.multi_reduction <add>, %77, %cst_28 [1] : vector<16x128xf32> to vector<16xf32>
    %79 = vector.shape_cast %78 : vector<16xf32> to vector<16x1xf32>
    %cst_29 = arith.constant 1.280000e+02 : f32
    %80 = vector.broadcast %cst_29 : f32 to vector<16x1xf32>
    %81 = arith.divf %79, %80 : vector<16x1xf32>
    %82 = vector.broadcast %81 : vector<16x1xf32> to vector<16x128xf32>
    %83 = arith.subf %77, %82 : vector<16x128xf32>
    %84 = arith.mulf %83, %83 : vector<16x128xf32>
    %cst_30 = arith.constant dense<0.000000e+00> : vector<16xf32>
    %85 = vector.multi_reduction <add>, %84, %cst_30 [1] : vector<16x128xf32> to vector<16xf32>
    %86 = vector.shape_cast %85 : vector<16xf32> to vector<16x1xf32>
    %cst_31 = arith.constant 1.280000e+02 : f32
    %87 = vector.broadcast %cst_31 : f32 to vector<16x1xf32>
    %88 = arith.divf %86, %87 : vector<16x1xf32>
    %89 = vector.broadcast %81 : vector<16x1xf32> to vector<16x128xf32>
    %90 = arith.subf %77, %89 : vector<16x128xf32>
    %cst_32 = arith.constant 9.99999974E-6 : f32
    %91 = vector.broadcast %cst_32 : f32 to vector<16x1xf32>
    %92 = arith.addf %88, %91 : vector<16x1xf32>
    %93 = math.rsqrt %92 : vector<16x1xf32>
    %94 = vector.broadcast %93 : vector<16x1xf32> to vector<16x128xf32>
    %95 = arith.mulf %90, %94 : vector<16x128xf32>
    %96 = vector.broadcast %75 : vector<1x128xf32> to vector<16x128xf32>
    %97 = arith.mulf %95, %96 : vector<16x128xf32>
    %98 = vector.broadcast %76 : vector<1x128xf32> to vector<16x128xf32>
    %99 = arith.addf %97, %98 : vector<16x128xf32>
    %100 = arith.truncf %99 : vector<16x128xf32> to vector<16x128xbf16>
    %c0_33 = arith.constant 0 : index
    %c0_34 = arith.constant 0 : index
    %c0_35 = arith.constant 0 : index
    %101 = vector.load %arg8[%c0_33, %c0_34, %c0_35] : memref<1x128x128xbf16, #tpu.memory_space<vmem>>, vector<1x128x128xbf16>
    %102 = vector.shape_cast %101 : vector<1x128x128xbf16> to vector<128x128xbf16>
    %cst_36 = arith.constant dense<0.000000e+00> : vector<16x128xf32>
    %103 = tpu.matmul %100, %102, %cst_36 {dimension_numbers = #tpu.dot_dimension_numbers<[1], [0], [0], [1], [0, 0, 1, 1], [], []>} : vector<16x128xbf16>, vector<128x128xbf16>, vector<16x128xf32> -> vector<16x128xf32>
    %104 = vector.extract_strided_slice %4 {offsets = [4, 0], sizes = [1, 128], strides = [1, 1]} : vector<15x128xf32> to vector<1x128xf32>
    %105 = vector.broadcast %104 : vector<1x128xf32> to vector<16x128xf32>
    %106 = arith.addf %103, %105 : vector<16x128xf32>
    %cst_37 = arith.constant 1.250000e-01 : f32
    %107 = vector.broadcast %cst_37 : f32 to vector<16x128xf32>
    %108 = arith.mulf %106, %107 : vector<16x128xf32>
    %c0_38 = arith.constant 0 : index
    %c0_39 = arith.constant 0 : index
    %c0_40 = arith.constant 0 : index
    %109 = vector.load %arg9[%c0_38, %c0_39, %c0_40] : memref<1x128x256xbf16, #tpu.memory_space<vmem>>, vector<1x128x256xbf16>
    %110 = vector.shape_cast %109 : vector<1x128x256xbf16> to vector<128x256xbf16>
    %cst_41 = arith.constant dense<0.000000e+00> : vector<16x256xf32>
    %111 = tpu.matmul %7, %110, %cst_41 {dimension_numbers = #tpu.dot_dimension_numbers<[1], [0], [0], [1], [0, 0, 1, 1], [], []>} : vector<16x128xbf16>, vector<128x256xbf16>, vector<16x256xf32> -> vector<16x256xf32>
    %112 = vector.extract_strided_slice %111 {offsets = [0, 0], sizes = [16, 128], strides = [1, 1]} : vector<16x256xf32> to vector<16x128xf32>
    %113 = vector.extract_strided_slice %4 {offsets = [5, 0], sizes = [1, 128], strides = [1, 1]} : vector<15x128xf32> to vector<1x128xf32>
    %114 = vector.broadcast %113 : vector<1x128xf32> to vector<16x128xf32>
    %115 = arith.addf %112, %114 : vector<16x128xf32>
    %116 = vector.extract_strided_slice %111 {offsets = [0, 128], sizes = [16, 128], strides = [1, 1]} : vector<16x256xf32> to vector<16x128xf32>
    %117 = vector.extract_strided_slice %4 {offsets = [6, 0], sizes = [1, 128], strides = [1, 1]} : vector<15x128xf32> to vector<1x128xf32>
    %118 = vector.broadcast %117 : vector<1x128xf32> to vector<16x128xf32>
    %119 = arith.addf %116, %118 : vector<16x128xf32>
    %120 = vector.extract_strided_slice %108 {offsets = [0, 0], sizes = [16, 64], strides = [1, 1]} : vector<16x128xf32> to vector<16x64xf32>
    %121 = arith.truncf %120 : vector<16x64xf32> to vector<16x64xbf16>
    %122 = vector.extract_strided_slice %115 {offsets = [0, 0], sizes = [16, 64], strides = [1, 1]} : vector<16x128xf32> to vector<16x64xf32>
    %123 = arith.truncf %122 : vector<16x64xf32> to vector<16x64xbf16>
    %124 = vector.extract_strided_slice %119 {offsets = [0, 0], sizes = [16, 64], strides = [1, 1]} : vector<16x128xf32> to vector<16x64xf32>
    %125 = arith.truncf %124 : vector<16x64xf32> to vector<16x64xbf16>
    %cst_42 = arith.constant dense<0.000000e+00> : vector<16x16xf32>
    %126 = tpu.matmul %121, %123, %cst_42 {dimension_numbers = #tpu.dot_dimension_numbers<[1], [1], [0], [0], [0, 0, 1, 0], [], []>} : vector<16x64xbf16>, vector<16x64xbf16>, vector<16x16xf32> -> vector<16x16xf32>
    %cst_43 = arith.constant dense<0xFF800000> : vector<16xf32>
    %127 = vector.multi_reduction <maximumf>, %126, %cst_43 [1] : vector<16x16xf32> to vector<16xf32>
    %128 = vector.shape_cast %127 : vector<16xf32> to vector<16x1xf32>
    %129 = vector.broadcast %128 : vector<16x1xf32> to vector<16x16xf32>
    %130 = arith.subf %126, %129 : vector<16x16xf32>
    %131 = math.exp %130 : vector<16x16xf32>
    %cst_44 = arith.constant dense<0.000000e+00> : vector<16xf32>
    %132 = vector.multi_reduction <add>, %131, %cst_44 [1] : vector<16x16xf32> to vector<16xf32>
    %133 = vector.shape_cast %132 : vector<16xf32> to vector<16x1xf32>
    %134 = tpu.reciprocal %133 {approx = true} : vector<16x1xf32> -> vector<16x1xf32>
    %135 = vector.broadcast %134 : vector<16x1xf32> to vector<16x16xf32>
    %136 = arith.mulf %131, %135 : vector<16x16xf32>
    %137 = arith.truncf %136 : vector<16x16xf32> to vector<16x16xbf16>
    %cst_45 = arith.constant dense<0.000000e+00> : vector<16x64xf32>
    %138 = tpu.matmul %137, %125, %cst_45 {dimension_numbers = #tpu.dot_dimension_numbers<[1], [0], [0], [1], [0, 0, 1, 1], [], []>} : vector<16x16xbf16>, vector<16x64xbf16>, vector<16x64xf32> -> vector<16x64xf32>
    %139 = arith.truncf %138 : vector<16x64xf32> to vector<16x64xbf16>
    %c0_46 = arith.constant 0 : index
    %c0_47 = arith.constant 0 : index
    %140 = vector.load %arg18[%c0_46, %c0_47] : memref<16x128xbf16, #tpu.memory_space<vmem>>, vector<16x64xbf16>
    tpu.vector_store %arg18[%c0_46, %c0_47], %139 {strides = array<i32>} : memref<16x128xbf16, #tpu.memory_space<vmem>>, vector<16x64xbf16>,
    %141 = vector.extract_strided_slice %108 {offsets = [0, 64], sizes = [16, 64], strides = [1, 1]} : vector<16x128xf32> to vector<16x64xf32>
    %142 = arith.truncf %141 : vector<16x64xf32> to vector<16x64xbf16>
    %143 = vector.extract_strided_slice %115 {offsets = [0, 64], sizes = [16, 64], strides = [1, 1]} : vector<16x128xf32> to vector<16x64xf32>
    %144 = arith.truncf %143 : vector<16x64xf32> to vector<16x64xbf16>
    %145 = vector.extract_strided_slice %119 {offsets = [0, 64], sizes = [16, 64], strides = [1, 1]} : vector<16x128xf32> to vector<16x64xf32>
    %146 = arith.truncf %145 : vector<16x64xf32> to vector<16x64xbf16>
    %cst_48 = arith.constant dense<0.000000e+00> : vector<16x16xf32>
    %147 = tpu.matmul %142, %144, %cst_48 {dimension_numbers = #tpu.dot_dimension_numbers<[1], [1], [0], [0], [0, 0, 1, 0], [], []>} : vector<16x64xbf16>, vector<16x64xbf16>, vector<16x16xf32> -> vector<16x16xf32>
    %cst_49 = arith.constant dense<0xFF800000> : vector<16xf32>
    %148 = vector.multi_reduction <maximumf>, %147, %cst_49 [1] : vector<16x16xf32> to vector<16xf32>
    %149 = vector.shape_cast %148 : vector<16xf32> to vector<16x1xf32>
    %150 = vector.broadcast %149 : vector<16x1xf32> to vector<16x16xf32>
    %151 = arith.subf %147, %150 : vector<16x16xf32>
    %152 = math.exp %151 : vector<16x16xf32>
    %cst_50 = arith.constant dense<0.000000e+00> : vector<16xf32>
    %153 = vector.multi_reduction <add>, %152, %cst_50 [1] : vector<16x16xf32> to vector<16xf32>
    %154 = vector.shape_cast %153 : vector<16xf32> to vector<16x1xf32>
    %155 = tpu.reciprocal %154 {approx = true} : vector<16x1xf32> -> vector<16x1xf32>
    %156 = vector.broadcast %155 : vector<16x1xf32> to vector<16x16xf32>
    %157 = arith.mulf %152, %156 : vector<16x16xf32>
    %158 = arith.truncf %157 : vector<16x16xf32> to vector<16x16xbf16>
    %cst_51 = arith.constant dense<0.000000e+00> : vector<16x64xf32>
    %159 = tpu.matmul %158, %146, %cst_51 {dimension_numbers = #tpu.dot_dimension_numbers<[1], [0], [0], [1], [0, 0, 1, 1], [], []>} : vector<16x16xbf16>, vector<16x64xbf16>, vector<16x64xf32> -> vector<16x64xf32>
    %160 = arith.truncf %159 : vector<16x64xf32> to vector<16x64xbf16>
    %c0_52 = arith.constant 0 : index
    %c64_53 = arith.constant 64 : index
    %161 = vector.load %arg18[%c0_52, %c64_53] : memref<16x128xbf16, #tpu.memory_space<vmem>>, vector<16x64xbf16>
    tpu.vector_store %arg18[%c0_52, %c64_53], %160 {strides = array<i32>} : memref<16x128xbf16, #tpu.memory_space<vmem>>, vector<16x64xbf16>,
    %c0_54 = arith.constant 0 : index
    %c0_55 = arith.constant 0 : index
    %162 = vector.load %arg18[%c0_54, %c0_55] : memref<16x128xbf16, #tpu.memory_space<vmem>>, vector<16x128xbf16>
    %c0_56 = arith.constant 0 : index
    %c0_57 = arith.constant 0 : index
    %c0_58 = arith.constant 0 : index
    %163 = vector.load %arg10[%c0_56, %c0_57, %c0_58] : memref<1x128x128xbf16, #tpu.memory_space<vmem>>, vector<1x128x128xbf16>
    %164 = vector.shape_cast %163 : vector<1x128x128xbf16> to vector<128x128xbf16>
    %cst_59 = arith.constant dense<0.000000e+00> : vector<16x128xf32>
    %165 = tpu.matmul %162, %164, %cst_59 {dimension_numbers = #tpu.dot_dimension_numbers<[1], [0], [0], [1], [0, 0, 1, 1], [], []>} : vector<16x128xbf16>, vector<128x128xbf16>, vector<16x128xf32> -> vector<16x128xf32>
    %166 = vector.extract_strided_slice %4 {offsets = [7, 0], sizes = [1, 128], strides = [1, 1]} : vector<15x128xf32> to vector<1x128xf32>
    %167 = vector.broadcast %166 : vector<1x128xf32> to vector<16x128xf32>
    %168 = arith.addf %165, %167 : vector<16x128xf32>
    %169 = vector.extract_strided_slice %4 {offsets = [11, 0], sizes = [1, 128], strides = [1, 1]} : vector<15x128xf32> to vector<1x128xf32>
    %170 = vector.extract_strided_slice %4 {offsets = [12, 0], sizes = [1, 128], strides = [1, 1]} : vector<15x128xf32> to vector<1x128xf32>
    %171 = arith.addf %99, %168 : vector<16x128xf32>
    %cst_60 = arith.constant dense<0.000000e+00> : vector<16xf32>
    %172 = vector.multi_reduction <add>, %171, %cst_60 [1] : vector<16x128xf32> to vector<16xf32>
    %173 = vector.shape_cast %172 : vector<16xf32> to vector<16x1xf32>
    %cst_61 = arith.constant 1.280000e+02 : f32
    %174 = vector.broadcast %cst_61 : f32 to vector<16x1xf32>
    %175 = arith.divf %173, %174 : vector<16x1xf32>
    %176 = vector.broadcast %175 : vector<16x1xf32> to vector<16x128xf32>
    %177 = arith.subf %171, %176 : vector<16x128xf32>
    %178 = arith.mulf %177, %177 : vector<16x128xf32>
    %cst_62 = arith.constant dense<0.000000e+00> : vector<16xf32>
    %179 = vector.multi_reduction <add>, %178, %cst_62 [1] : vector<16x128xf32> to vector<16xf32>
    %180 = vector.shape_cast %179 : vector<16xf32> to vector<16x1xf32>
    %cst_63 = arith.constant 1.280000e+02 : f32
    %181 = vector.broadcast %cst_63 : f32 to vector<16x1xf32>
    %182 = arith.divf %180, %181 : vector<16x1xf32>
    %183 = vector.broadcast %175 : vector<16x1xf32> to vector<16x128xf32>
    %184 = arith.subf %171, %183 : vector<16x128xf32>
    %cst_64 = arith.constant 9.99999974E-6 : f32
    %185 = vector.broadcast %cst_64 : f32 to vector<16x1xf32>
    %186 = arith.addf %182, %185 : vector<16x1xf32>
    %187 = math.rsqrt %186 : vector<16x1xf32>
    %188 = vector.broadcast %187 : vector<16x1xf32> to vector<16x128xf32>
    %189 = arith.mulf %184, %188 : vector<16x128xf32>
    %190 = vector.broadcast %169 : vector<1x128xf32> to vector<16x128xf32>
    %191 = arith.mulf %189, %190 : vector<16x128xf32>
    %192 = vector.broadcast %170 : vector<1x128xf32> to vector<16x128xf32>
    %193 = arith.addf %191, %192 : vector<16x128xf32>
    %194 = arith.truncf %193 : vector<16x128xf32> to vector<16x128xbf16>
    %c0_65 = arith.constant 0 : index
    %c0_66 = arith.constant 0 : index
    %c0_67 = arith.constant 0 : index
    %195 = vector.load %arg11[%c0_65, %c0_66, %c0_67] : memref<1x128x256xbf16, #tpu.memory_space<vmem>>, vector<1x128x256xbf16>
    %196 = vector.shape_cast %195 : vector<1x128x256xbf16> to vector<128x256xbf16>
    %cst_68 = arith.constant dense<0.000000e+00> : vector<16x256xf32>
    %197 = tpu.matmul %194, %196, %cst_68 {dimension_numbers = #tpu.dot_dimension_numbers<[1], [0], [0], [1], [0, 0, 1, 1], [], []>} : vector<16x128xbf16>, vector<128x256xbf16>, vector<16x256xf32> -> vector<16x256xf32>
    %c0_69 = arith.constant 0 : index
    %c0_70 = arith.constant 0 : index
    %c0_71 = arith.constant 0 : index
    %198 = vector.load %arg14[%c0_69, %c0_70, %c0_71] : memref<1x1x256xf32, #tpu.memory_space<vmem>>, vector<1x1x256xf32>
    %199 = vector.shape_cast %198 : vector<1x1x256xf32> to vector<1x256xf32>
    %200 = vector.broadcast %199 : vector<1x256xf32> to vector<16x256xf32>
    %201 = arith.addf %197, %200 : vector<16x256xf32>
    %cst_72 = arith.constant 0.000000e+00 : f32
    %202 = vector.broadcast %cst_72 : f32 to vector<16x256xf32>
    %203 = arith.maximumf %201, %202 : vector<16x256xf32>
    %204 = arith.truncf %203 : vector<16x256xf32> to vector<16x256xbf16>
    %c0_73 = arith.constant 0 : index
    %c0_74 = arith.constant 0 : index
    %c0_75 = arith.constant 0 : index
    %205 = vector.load %arg12[%c0_73, %c0_74, %c0_75] : memref<1x256x128xbf16, #tpu.memory_space<vmem>>, vector<1x256x128xbf16>
    %206 = vector.shape_cast %205 : vector<1x256x128xbf16> to vector<256x128xbf16>
    %cst_76 = arith.constant dense<0.000000e+00> : vector<16x128xf32>
    %207 = tpu.matmul %204, %206, %cst_76 {dimension_numbers = #tpu.dot_dimension_numbers<[1], [0], [0], [1], [0, 0, 1, 1], [], []>} : vector<16x256xbf16>, vector<256x128xbf16>, vector<16x128xf32> -> vector<16x128xf32>
    %208 = vector.extract_strided_slice %4 {offsets = [8, 0], sizes = [1, 128], strides = [1, 1]} : vector<15x128xf32> to vector<1x128xf32>
    %209 = vector.broadcast %208 : vector<1x128xf32> to vector<16x128xf32>
    %210 = arith.addf %207, %209 : vector<16x128xf32>
    %211 = vector.extract_strided_slice %4 {offsets = [13, 0], sizes = [1, 128], strides = [1, 1]} : vector<15x128xf32> to vector<1x128xf32>
    %212 = vector.extract_strided_slice %4 {offsets = [14, 0], sizes = [1, 128], strides = [1, 1]} : vector<15x128xf32> to vector<1x128xf32>
    %213 = arith.addf %193, %210 : vector<16x128xf32>
    %cst_77 = arith.constant dense<0.000000e+00> : vector<16xf32>
    %214 = vector.multi_reduction <add>, %213, %cst_77 [1] : vector<16x128xf32> to vector<16xf32>
    %215 = vector.shape_cast %214 : vector<16xf32> to vector<16x1xf32>
    %cst_78 = arith.constant 1.280000e+02 : f32
    %216 = vector.broadcast %cst_78 : f32 to vector<16x1xf32>
    %217 = arith.divf %215, %216 : vector<16x1xf32>
    %218 = vector.broadcast %217 : vector<16x1xf32> to vector<16x128xf32>
    %219 = arith.subf %213, %218 : vector<16x128xf32>
    %220 = arith.mulf %219, %219 : vector<16x128xf32>
    %cst_79 = arith.constant dense<0.000000e+00> : vector<16xf32>
    %221 = vector.multi_reduction <add>, %220, %cst_79 [1] : vector<16x128xf32> to vector<16xf32>
    %222 = vector.shape_cast %221 : vector<16xf32> to vector<16x1xf32>
    %cst_80 = arith.constant 1.280000e+02 : f32
    %223 = vector.broadcast %cst_80 : f32 to vector<16x1xf32>
    %224 = arith.divf %222, %223 : vector<16x1xf32>
    %225 = vector.broadcast %217 : vector<16x1xf32> to vector<16x128xf32>
    %226 = arith.subf %213, %225 : vector<16x128xf32>
    %cst_81 = arith.constant 9.99999974E-6 : f32
    %227 = vector.broadcast %cst_81 : f32 to vector<16x1xf32>
    %228 = arith.addf %224, %227 : vector<16x1xf32>
    %229 = math.rsqrt %228 : vector<16x1xf32>
    %230 = vector.broadcast %229 : vector<16x1xf32> to vector<16x128xf32>
    %231 = arith.mulf %226, %230 : vector<16x128xf32>
    %232 = vector.broadcast %211 : vector<1x128xf32> to vector<16x128xf32>
    %233 = arith.mulf %231, %232 : vector<16x128xf32>
    %234 = vector.broadcast %212 : vector<1x128xf32> to vector<16x128xf32>
    %235 = arith.addf %233, %234 : vector<16x128xf32>
    %c0_82 = arith.constant 0 : index
    %c0_83 = arith.constant 0 : index
    %236 = vector.load %arg17[%c0_82, %c0_83] : memref<16x128xf32, #tpu.memory_space<vmem>>, vector<16x128xf32>
    tpu.vector_store %arg17[%c0_82, %c0_83], %235 {strides = array<i32>} : memref<16x128xf32, #tpu.memory_space<vmem>>, vector<16x128xf32>,
    %c1_i32 = arith.constant 1 : i32
    %237 = arith.cmpi eq, %arg1, %c1_i32 : i32
    %238 = arith.extui %237 : i1 to i32
    %c0_i32_84 = arith.constant 0 : i32
    %239 = arith.cmpi ne, %238, %c0_i32_84 : i32
    scf.if %239 {
      %c0_85 = arith.constant 0 : index
      %c0_86 = arith.constant 0 : index
      %c0_87 = arith.constant 0 : index
      %240 = vector.load %arg15[%c0_85, %c0_86, %c0_87] : memref<1x16x128xf32, #tpu.memory_space<vmem>>, vector<1x16x128xf32>
      %241 = vector.shape_cast %240 : vector<1x16x128xf32> to vector<16x128xf32>
      %242 = vector.shape_cast %235 : vector<16x128xf32> to vector<1x16x128xf32>
      tpu.vector_store %arg15[%c0_85, %c0_86, %c0_87], %242 {strides = array<i32>} : memref<1x16x128xf32, #tpu.memory_space<vmem>>, vector<1x16x128xf32>,
    } else {
    }
    return
  }
  func.func @transform_0(%arg0: i32, %arg1: i32) -> (i32, i32, i32) {
    %c0_i32 = arith.constant 0 : i32
    %c0_i32_0 = arith.constant 0 : i32
    %c0_i32_1 = arith.constant 0 : i32
    return %arg0, %c0_i32, %c0_i32_0 : i32, i32, i32
  }
  func.func @transform_1(%arg0: i32, %arg1: i32) -> (i32, i32, i32) {
    %c0_i32 = arith.constant 0 : i32
    %c0_i32_0 = arith.constant 0 : i32
    %c0_i32_1 = arith.constant 0 : i32
    %c0_i32_2 = arith.constant 0 : i32
    return %c0_i32, %c0_i32_0, %c0_i32_1 : i32, i32, i32
  }
  func.func @transform_2(%arg0: i32, %arg1: i32) -> (i32, i32) {
    %c0_i32 = arith.constant 0 : i32
    %c0_i32_0 = arith.constant 0 : i32
    %c0_i32_1 = arith.constant 0 : i32
    return %c0_i32, %c0_i32_0 : i32, i32
  }
  func.func @transform_3(%arg0: i32, %arg1: i32) -> (i32, i32) {
    %c0_i32 = arith.constant 0 : i32
    %c0_i32_0 = arith.constant 0 : i32
    %c0_i32_1 = arith.constant 0 : i32
    return %c0_i32, %c0_i32_0 : i32, i32
  }
  func.func @transform_4(%arg0: i32, %arg1: i32) -> (i32, i32, i32) {
    %c0_i32 = arith.constant 0 : i32
    %c0_i32_0 = arith.constant 0 : i32
    %c0_i32_1 = arith.constant 0 : i32
    return %arg1, %c0_i32, %c0_i32_0 : i32, i32, i32
  }
  func.func @transform_5(%arg0: i32, %arg1: i32) -> (i32, i32, i32) {
    %c0_i32 = arith.constant 0 : i32
    %c0_i32_0 = arith.constant 0 : i32
    %c0_i32_1 = arith.constant 0 : i32
    return %arg1, %c0_i32, %c0_i32_0 : i32, i32, i32
  }
  func.func @transform_6(%arg0: i32, %arg1: i32) -> (i32, i32, i32) {
    %c0_i32 = arith.constant 0 : i32
    %c0_i32_0 = arith.constant 0 : i32
    %c0_i32_1 = arith.constant 0 : i32
    return %arg1, %c0_i32, %c0_i32_0 : i32, i32, i32
  }
  func.func @transform_7(%arg0: i32, %arg1: i32) -> (i32, i32, i32) {
    %c0_i32 = arith.constant 0 : i32
    %c0_i32_0 = arith.constant 0 : i32
    %c0_i32_1 = arith.constant 0 : i32
    return %arg1, %c0_i32, %c0_i32_0 : i32, i32, i32
  }
  func.func @transform_8(%arg0: i32, %arg1: i32) -> (i32, i32, i32) {
    %c0_i32 = arith.constant 0 : i32
    %c0_i32_0 = arith.constant 0 : i32
    %c0_i32_1 = arith.constant 0 : i32
    return %arg1, %c0_i32, %c0_i32_0 : i32, i32, i32
  }
  func.func @transform_9(%arg0: i32, %arg1: i32) -> (i32, i32, i32) {
    %c0_i32 = arith.constant 0 : i32
    %c0_i32_0 = arith.constant 0 : i32
    %c0_i32_1 = arith.constant 0 : i32
    return %arg1, %c0_i32, %c0_i32_0 : i32, i32, i32
  }
  func.func @transform_10(%arg0: i32, %arg1: i32) -> (i32, i32, i32) {
    %c0_i32 = arith.constant 0 : i32
    %c0_i32_0 = arith.constant 0 : i32
    %c0_i32_1 = arith.constant 0 : i32
    return %arg1, %c0_i32, %c0_i32_0 : i32, i32, i32
  }
  func.func @transform_11(%arg0: i32, %arg1: i32) -> (i32, i32, i32) {
    %c0_i32 = arith.constant 0 : i32
    %c0_i32_0 = arith.constant 0 : i32
    %c0_i32_1 = arith.constant 0 : i32
    return %arg1, %c0_i32, %c0_i32_0 : i32, i32, i32
  }
  func.func @transform_12(%arg0: i32, %arg1: i32) -> (i32, i32, i32) {
    %c0_i32 = arith.constant 0 : i32
    %c0_i32_0 = arith.constant 0 : i32
    %c0_i32_1 = arith.constant 0 : i32
    return %arg1, %c0_i32, %c0_i32_0 : i32, i32, i32
  }
  func.func @transform_13(%arg0: i32, %arg1: i32) -> (i32, i32, i32) {
    %c0_i32 = arith.constant 0 : i32
    %c0_i32_0 = arith.constant 0 : i32
    %c0_i32_1 = arith.constant 0 : i32
    return %arg0, %c0_i32, %c0_i32_0 : i32, i32, i32
  }
}

</mosaic_0001>

<llo_original>
// kernel: tpu_custom_call.1
$region0: #{tpu_custom_call.1}
  #allocation0 [shape = 'u32[]', space=smem, size = 0x4, offset = 0x4, fixed_abs, tag = 'smem constant byte address 0x4 - core index']
  #allocation1 [shape = 'u32[72,128]{1,0:T(1,128)}', space=vmem, size = 0x9000, scoped, tag = 'internal scratch']
  #allocation2 [shape = 'f32[16,128]{1,0:T(8,128)}', space=vmem, size = 0x2000, scoped, tag = 'scratch operand']
  #allocation3 [shape = 'f32[16,128]{1,0:T(8,128)}', space=vmem, size = 0x2000, scoped, tag = 'scratch operand']
  #allocation4 [shape = 'bf16[16,128]{1,0:T(8,128)(2,1)}', space=vmem, size = 0x1000, scoped, tag = 'scratch operand']
  %s0 = inlined_call_operand.vmem [shape: f32[2,16,128], index: 0, kind: input, shape index: {}]
  %s1 = inlined_call_operand.vmem [shape: f32[1,16,128], index: 1, kind: input, shape index: {}]
  %s2 = inlined_call_operand.hbm [shape: bf16[128,128], index: 2, kind: input, shape index: {}]
  %s3 = inlined_call_operand.vmem [shape: f32[1,128], index: 3, kind: input, shape index: {}]
  %s4 = inlined_call_operand.hbm [shape: bf16[2,128,384], index: 4, kind: input, shape index: {}]
  %s5 = inlined_call_operand.hbm [shape: bf16[2,128,128], index: 5, kind: input, shape index: {}]
  %s6 = inlined_call_operand.hbm [shape: bf16[2,128,128], index: 6, kind: input, shape index: {}]
  %s7 = inlined_call_operand.hbm [shape: bf16[2,128,256], index: 7, kind: input, shape index: {}]
  %s8 = inlined_call_operand.hbm [shape: bf16[2,128,128], index: 8, kind: input, shape index: {}]
  %s9 = inlined_call_operand.hbm [shape: bf16[2,128,256], index: 9, kind: input, shape index: {}]
  %s10 = inlined_call_operand.hbm [shape: bf16[2,256,128], index: 10, kind: input, shape index: {}]
  %s11 = inlined_call_operand.vmem [shape: f32[2,15,128], index: 11, kind: input, shape index: {}]
  %s12 = inlined_call_operand.vmem [shape: f32[2,1,256], index: 12, kind: input, shape index: {}]
  %s13 = inlined_call_operand.hbm [shape: f32[2,16,128], index: 13, kind: output, shape index: {}]
  %s14 = sld [smem:[#allocation0]]
  $region125: #{tpu_custom_call.1} parent=0
    _
  %s16 = ssub.s32 1, %s14
  %s17 = scalar_select 0, %s16, %s14
  $region1: #{tpu_custom_call.1} parent=0
    #allocation5 [shape = 'u8[32768]{0}', space=vmem, size = 0x8000, scoped, tag = 'input window, operand 2, single buffered']
    #allocation6 [shape = 's32[2]{0}', space=sflag, size = 0x8, scoped, tag = 'scoped memory for tpu_custom_call.1']
    #allocation7 [shape = 's32[2]{0}', space=sflag, size = 0x8, scoped, tag = 'scoped memory for tpu_custom_call.1']
    #allocation8 [shape = 'u8[196608]{0}', space=vmem, size = 0x30000, scoped, tag = 'input window, operand 4']
    #allocation9 [shape = 's32[2]{0}', space=sflag, size = 0x8, scoped, tag = 'scoped memory for tpu_custom_call.1']
    #allocation10 [shape = 'u8[65536]{0}', space=vmem, size = 0x10000, scoped, tag = 'input window, operand 5']
    #allocation11 [shape = 'u8[65536]{0}', space=vmem, size = 0x10000, scoped, tag = 'input window, operand 6']
    #allocation12 [shape = 's32[2]{0}', space=sflag, size = 0x8, scoped, tag = 'scoped memory for tpu_custom_call.1']
    #allocation13 [shape = 'u8[131072]{0}', space=vmem, size = 0x20000, scoped, tag = 'input window, operand 7']
    #allocation14 [shape = 'u8[65536]{0}', space=vmem, size = 0x10000, scoped, tag = 'input window, operand 8']
    #allocation15 [shape = 's32[2]{0}', space=sflag, size = 0x8, scoped, tag = 'scoped memory for tpu_custom_call.1']
    #allocation16 [shape = 'u8[131072]{0}', space=vmem, size = 0x20000, scoped, tag = 'input window, operand 9']
    #allocation17 [shape = 'u8[131072]{0}', space=vmem, size = 0x20000, scoped, tag = 'input window, operand 10']
    #allocation18 [shape = 's32[2]{0}', space=sflag, size = 0x8, scoped, tag = 'scoped memory for tpu_custom_call.1']
    #allocation19 [shape = 'u8[16384]{0}', space=vmem, size = 0x4000, scoped, tag = 'output window, operand 0']
    %18 = vsyncpa [#allocation6], 0
    %19 = vsyncpa [#allocation9], 0
    %s20 = scalar_lea.sflag [#allocation9], 1
    %21 = vsyncpa %s20, 0
    %22 = vsyncpa [#allocation12], 0
    %s23 = scalar_lea.sflag [#allocation12], 1
    %24 = vsyncpa %s23, 0
    %25 = vsyncpa [#allocation15], 0
    %s26 = scalar_lea.sflag [#allocation15], 1
    %27 = vsyncpa %s26, 0
    %28 = vsyncpa [#allocation18], 0
    %s29 = scalar_lea.sflag [#allocation18], 1
    %30 = vsyncpa %s29, 0
    %31 = vsyncpa [#allocation7], 0
    %s32 = scalar_lea.sflag [#allocation7], 1
    %33 = vsyncpa %s32, 0
    loop: start=0, step=1, limit=6
    $region2: #{tpu_custom_call.1} parent=1 // loop_pre_header
      _
    $region3: #{tpu_custom_call.1} parent=1 // loop_header
      %s35 = sphi 0, %s39
      %p36 = scmp.ge.s32.totalorder %s35, 6
      %s42 = sphi 0, %s54
      %s43 = sphi 0, %s50
      %s44 = sphi 0, %s42
      %s45 = sphi 0, %s43
      %s46 = sphi 0, %s44
      %s47 = sphi 0, %s45
      %s57 = sphi 0, %s59
      %s60 = sphi 0, %s57
      %s61 = sphi 0, %s60
      %s77 = sphi 0, %s61
      %s81 = sphi 0, %s81
      %s83 = sphi 0, %s81
      %s84 = sphi 0, %s83
      %s98 = sphi 0, %s84
      %s102 = sphi 0, %s102
      %s104 = sphi 0, %s102
      %s105 = sphi 0, %s104
      %s119 = sphi 0, %s105
      %s123 = sphi 0, %s123
      %s125 = sphi 0, %s123
      %s126 = sphi 0, %s125
      %s140 = sphi 0, %s126
      %s146 = sphi 0, %s148
      %s149 = sphi 0, %s146
      %s150 = sphi 0, %s149
      %s166 = sphi 0, %s150
      %s172 = sphi 0, %s174
      %s175 = sphi 0, %s172
      %s176 = sphi 0, %s175
      %s192 = sphi 0, %s176
      %s198 = sphi 0, %s200
      %s201 = sphi 0, %s198
      %s202 = sphi 0, %s201
      %s218 = sphi 0, %s202
      %s224 = sphi 0, %s226
      %s227 = sphi 0, %s224
      %s228 = sphi 0, %s227
      %s244 = sphi 0, %s228
      %s250 = sphi 0, %s252
      %s253 = sphi 0, %s250
      %s254 = sphi 0, %s253
      %s270 = sphi 0, %s254
      %s276 = sphi 0, %s278
      %s279 = sphi 0, %s276
      %s280 = sphi 0, %s279
      %s296 = sphi 0, %s280
      %s302 = sphi 0, %s304
      %s305 = sphi 0, %s302
      %s306 = sphi 0, %s305
      %s322 = sphi 0, %s306
      %s328 = sphi 0, %s330
      %s331 = sphi 0, %s328
      %s332 = sphi 0, %s331
      %s348 = sphi 0, %s332
      %s354 = sphi 0, %s356
      %s357 = sphi 0, %s354
      %s358 = sphi 0, %s357
      %s374 = sphi 0, %s358
      %s380 = sphi 0, %s382
      %s383 = sphi 0, %s380
      %s384 = sphi 0, %s383
      %s400 = sphi 0, %s384
    $region4: #{tpu_custom_call.1} parent=1 // loop_header_branch
      %38 = sbr.rel (%p36) target = $region8
    $region5: #{tpu_custom_call.1} parent=1 // loop_body
      %s40 = ssub.s32 %s35, 1
      %s41 = ssub.s32 %s35, 2
      %s48 = sadd.s32 1, %s43
      %p49 = scmp.ge.s32.totalorder %s48, 2
      %s50 = scalar_select %p49, 0, %s48
      %s51 = sadd.s32 1, %s42
      %s52 = scalar_select %p49, %s51, %s42
      %p53 = scmp.ge.s32.totalorder %s52, 2
      %s54 = scalar_select %p53, 0, %s52
      %s55 = ssub.s32 %s42, %s54
      %p56 = scmp.eq.s32.totalorder %s55, 0
      %s58 = sadd.s32 %s57, 1
      %s59 = scalar_select %p56, %s57, %s58
      %p62 = pneg %p56
      %p63 = scmp.eq.s32.totalorder %s35, 3
      %p64 = por %p62, %p63
      %p65 = scmp.ne.s32.totalorder %s57, %s60
      %p66 = scmp.eq.s32.totalorder %s35, 0
      %p67 = por %p65, %p66
      %p68 = scmp.ne.s32.totalorder %s57, %s60
      %p69 = scmp.eq.s32.totalorder %s40, 3
      %p70 = por %p68, %p69
      %p71 = scmp.ne.s32.totalorder %s60, %s61
      %p72 = scmp.eq.s32.totalorder %s40, 0
      %p73 = por %p71, %p72
      %p74 = scmp.ne.s32.totalorder %s60, %s61
      %p75 = scmp.eq.s32.totalorder %s41, 3
      %p76 = por %p74, %p75
      %p78 = scmp.ne.s32.totalorder %s61, %s77
      %p79 = scmp.eq.s32.totalorder %s41, 0
      %p80 = por %p78, %p79
      %s82 = sadd.s32 %s81, 1
      %p85 = scmp.eq.s32.totalorder %s35, 3
      %p86 = scmp.ne.s32.totalorder %s81, %s83
      %p87 = scmp.eq.s32.totalorder %s35, 0
      %p88 = por %p86, %p87
      %p89 = scmp.ne.s32.totalorder %s81, %s83
      %p90 = scmp.eq.s32.totalorder %s40, 3
      %p91 = por %p89, %p90
      %p92 = scmp.ne.s32.totalorder %s83, %s84
      %p93 = scmp.eq.s32.totalorder %s40, 0
      %p94 = por %p92, %p93
      %p95 = scmp.ne.s32.totalorder %s83, %s84
      %p96 = scmp.eq.s32.totalorder %s41, 3
      %p97 = por %p95, %p96
      %p99 = scmp.ne.s32.totalorder %s84, %s98
      %p100 = scmp.eq.s32.totalorder %s41, 0
      %p101 = por %p99, %p100
      %s103 = sadd.s32 %s102, 1
      %p106 = scmp.eq.s32.totalorder %s35, 3
      %p107 = scmp.ne.s32.totalorder %s102, %s104
      %p108 = scmp.eq.s32.totalorder %s35, 0
      %p109 = por %p107, %p108
      %p110 = scmp.ne.s32.totalorder %s102, %s104
      %p111 = scmp.eq.s32.totalorder %s40, 3
      %p112 = por %p110, %p111
      %p113 = scmp.ne.s32.totalorder %s104, %s105
      %p114 = scmp.eq.s32.totalorder %s40, 0
      %p115 = por %p113, %p114
      %p116 = scmp.ne.s32.totalorder %s104, %s105
      %p117 = scmp.eq.s32.totalorder %s41, 3
      %p118 = por %p116, %p117
      %p120 = scmp.ne.s32.totalorder %s105, %s119
      %p121 = scmp.eq.s32.totalorder %s41, 0
      %p122 = por %p120, %p121
      %s124 = sadd.s32 %s123, 1
      %p127 = scmp.eq.s32.totalorder %s35, 3
      %p128 = scmp.ne.s32.totalorder %s123, %s125
      %p129 = scmp.eq.s32.totalorder %s35, 0
      %p130 = por %p128, %p129
      %p131 = scmp.ne.s32.totalorder %s123, %s125
      %p132 = scmp.eq.s32.totalorder %s40, 3
      %p133 = por %p131, %p132
      %p134 = scmp.ne.s32.totalorder %s125, %s126
      %p135 = scmp.eq.s32.totalorder %s40, 0
      %p136 = por %p134, %p135
      %p137 = scmp.ne.s32.totalorder %s125, %s126
      %p138 = scmp.eq.s32.totalorder %s41, 3
      %p139 = por %p137, %p138
      %p141 = scmp.ne.s32.totalorder %s126, %s140
      %p142 = scmp.eq.s32.totalorder %s41, 0
      %p143 = por %p141, %p142
      %s144 = ssub.s32 %s43, %s50
      %p145 = scmp.eq.s32.totalorder %s144, 0
      %s147 = sadd.s32 %s146, 1
      %s148 = scalar_select %p145, %s146, %s147
      %p151 = pneg %p145
      %p152 = scmp.eq.s32.totalorder %s35, 3
      %p153 = por %p151, %p152
      %p154 = scmp.ne.s32.totalorder %s146, %s149
      %p155 = scmp.eq.s32.totalorder %s35, 0
      %p156 = por %p154, %p155
      %p157 = scmp.ne.s32.totalorder %s146, %s149
      %p158 = scmp.eq.s32.totalorder %s40, 3
      %p159 = por %p157, %p158
      %p160 = scmp.ne.s32.totalorder %s149, %s150
      %p161 = scmp.eq.s32.totalorder %s40, 0
      %p162 = por %p160, %p161
      %p163 = scmp.ne.s32.totalorder %s149, %s150
      %p164 = scmp.eq.s32.totalorder %s41, 3
      %p165 = por %p163, %p164
      %p167 = scmp.ne.s32.totalorder %s150, %s166
      %p168 = scmp.eq.s32.totalorder %s41, 0
      %p169 = por %p167, %p168
      %s170 = ssub.s32 %s43, %s50
      %p171 = scmp.eq.s32.totalorder %s170, 0
      %s173 = sadd.s32 %s172, 1
      %s174 = scalar_select %p171, %s172, %s173
      %p177 = pneg %p171
      %p178 = scmp.eq.s32.totalorder %s35, 3
      %p179 = por %p177, %p178
      %p180 = scmp.ne.s32.totalorder %s172, %s175
      %p181 = scmp.eq.s32.totalorder %s35, 0
      %p182 = por %p180, %p181
      %p183 = scmp.ne.s32.totalorder %s172, %s175
      %p184 = scmp.eq.s32.totalorder %s40, 3
      %p185 = por %p183, %p184
      %p186 = scmp.ne.s32.totalorder %s175, %s176
      %p187 = scmp.eq.s32.totalorder %s40, 0
      %p188 = por %p186, %p187
      %p189 = scmp.ne.s32.totalorder %s175, %s176
      %p190 = scmp.eq.s32.totalorder %s41, 3
      %p191 = por %p189, %p190
      %p193 = scmp.ne.s32.totalorder %s176, %s192
      %p194 = scmp.eq.s32.totalorder %s41, 0
      %p195 = por %p193, %p194
      %s196 = ssub.s32 %s43, %s50
      %p197 = scmp.eq.s32.totalorder %s196, 0
      %s199 = sadd.s32 %s198, 1
      %s200 = scalar_select %p197, %s198, %s199
      %p203 = pneg %p197
      %p204 = scmp.eq.s32.totalorder %s35, 3
      %p205 = por %p203, %p204
      %p206 = scmp.ne.s32.totalorder %s198, %s201
      %p207 = scmp.eq.s32.totalorder %s35, 0
      %p208 = por %p206, %p207
      %p209 = scmp.ne.s32.totalorder %s198, %s201
      %p210 = scmp.eq.s32.totalorder %s40, 3
      %p211 = por %p209, %p210
      %p212 = scmp.ne.s32.totalorder %s201, %s202
      %p213 = scmp.eq.s32.totalorder %s40, 0
      %p214 = por %p212, %p213
      %p215 = scmp.ne.s32.totalorder %s201, %s202
      %p216 = scmp.eq.s32.totalorder %s41, 3
      %p217 = por %p215, %p216
      %p219 = scmp.ne.s32.totalorder %s202, %s218
      %p220 = scmp.eq.s32.totalorder %s41, 0
      %p221 = por %p219, %p220
      %s222 = ssub.s32 %s43, %s50
      %p223 = scmp.eq.s32.totalorder %s222, 0
      %s225 = sadd.s32 %s224, 1
      %s226 = scalar_select %p223, %s224, %s225
      %p229 = pneg %p223
      %p230 = scmp.eq.s32.totalorder %s35, 3
      %p231 = por %p229, %p230
      %p232 = scmp.ne.s32.totalorder %s224, %s227
      %p233 = scmp.eq.s32.totalorder %s35, 0
      %p234 = por %p232, %p233
      %p235 = scmp.ne.s32.totalorder %s224, %s227
      %p236 = scmp.eq.s32.totalorder %s40, 3
      %p237 = por %p235, %p236
      %p238 = scmp.ne.s32.totalorder %s227, %s228
      %p239 = scmp.eq.s32.totalorder %s40, 0
      %p240 = por %p238, %p239
      %p241 = scmp.ne.s32.totalorder %s227, %s228
      %p242 = scmp.eq.s32.totalorder %s41, 3
      %p243 = por %p241, %p242
      %p245 = scmp.ne.s32.totalorder %s228, %s244
      %p246 = scmp.eq.s32.totalorder %s41, 0
      %p247 = por %p245, %p246
      %s248 = ssub.s32 %s43, %s50
      %p249 = scmp.eq.s32.totalorder %s248, 0
      %s251 = sadd.s32 %s250, 1
      %s252 = scalar_select %p249, %s250, %s251
      %p255 = pneg %p249
      %p256 = scmp.eq.s32.totalorder %s35, 3
      %p257 = por %p255, %p256
      %p258 = scmp.ne.s32.totalorder %s250, %s253
      %p259 = scmp.eq.s32.totalorder %s35, 0
      %p260 = por %p258, %p259
      %p261 = scmp.ne.s32.totalorder %s250, %s253
      %p262 = scmp.eq.s32.totalorder %s40, 3
      %p263 = por %p261, %p262
      %p264 = scmp.ne.s32.totalorder %s253, %s254
      %p265 = scmp.eq.s32.totalorder %s40, 0
      %p266 = por %p264, %p265
      %p267 = scmp.ne.s32.totalorder %s253, %s254
      %p268 = scmp.eq.s32.totalorder %s41, 3
      %p269 = por %p267, %p268
      %p271 = scmp.ne.s32.totalorder %s254, %s270
      %p272 = scmp.eq.s32.totalorder %s41, 0
      %p273 = por %p271, %p272
      %s274 = ssub.s32 %s43, %s50
      %p275 = scmp.eq.s32.totalorder %s274, 0
      %s277 = sadd.s32 %s276, 1
      %s278 = scalar_select %p275, %s276, %s277
      %p281 = pneg %p275
      %p282 = scmp.eq.s32.totalorder %s35, 3
      %p283 = por %p281, %p282
      %p284 = scmp.ne.s32.totalorder %s276, %s279
      %p285 = scmp.eq.s32.totalorder %s35, 0
      %p286 = por %p284, %p285
      %p287 = scmp.ne.s32.totalorder %s276, %s279
      %p288 = scmp.eq.s32.totalorder %s40, 3
      %p289 = por %p287, %p288
      %p290 = scmp.ne.s32.totalorder %s279, %s280
      %p291 = scmp.eq.s32.totalorder %s40, 0
      %p292 = por %p290, %p291
      %p293 = scmp.ne.s32.totalorder %s279, %s280
      %p294 = scmp.eq.s32.totalorder %s41, 3
      %p295 = por %p293, %p294
      %p297 = scmp.ne.s32.totalorder %s280, %s296
      %p298 = scmp.eq.s32.totalorder %s41, 0
      %p299 = por %p297, %p298
      %s300 = ssub.s32 %s43, %s50
      %p301 = scmp.eq.s32.totalorder %s300, 0
      %s303 = sadd.s32 %s302, 1
      %s304 = scalar_select %p301, %s302, %s303
      %p307 = pneg %p301
      %p308 = scmp.eq.s32.totalorder %s35, 3
      %p309 = por %p307, %p308
      %p310 = scmp.ne.s32.totalorder %s302, %s305
      %p311 = scmp.eq.s32.totalorder %s35, 0
      %p312 = por %p310, %p311
      %p313 = scmp.ne.s32.totalorder %s302, %s305
      %p314 = scmp.eq.s32.totalorder %s40, 3
      %p315 = por %p313, %p314
      %p316 = scmp.ne.s32.totalorder %s305, %s306
      %p317 = scmp.eq.s32.totalorder %s40, 0
      %p318 = por %p316, %p317
      %p319 = scmp.ne.s32.totalorder %s305, %s306
      %p320 = scmp.eq.s32.totalorder %s41, 3
      %p321 = por %p319, %p320
      %p323 = scmp.ne.s32.totalorder %s306, %s322
      %p324 = scmp.eq.s32.totalorder %s41, 0
      %p325 = por %p323, %p324
      %s326 = ssub.s32 %s43, %s50
      %p327 = scmp.eq.s32.totalorder %s326, 0
      %s329 = sadd.s32 %s328, 1
      %s330 = scalar_select %p327, %s328, %s329
      %p333 = pneg %p327
      %p334 = scmp.eq.s32.totalorder %s35, 3
      %p335 = por %p333, %p334
      %p336 = scmp.ne.s32.totalorder %s328, %s331
      %p337 = scmp.eq.s32.totalorder %s35, 0
      %p338 = por %p336, %p337
      %p339 = scmp.ne.s32.totalorder %s328, %s331
      %p340 = scmp.eq.s32.totalorder %s40, 3
      %p341 = por %p339, %p340
      %p342 = scmp.ne.s32.totalorder %s331, %s332
      %p343 = scmp.eq.s32.totalorder %s40, 0
      %p344 = por %p342, %p343
      %p345 = scmp.ne.s32.totalorder %s331, %s332
      %p346 = scmp.eq.s32.totalorder %s41, 3
      %p347 = por %p345, %p346
      %p349 = scmp.ne.s32.totalorder %s332, %s348
      %p350 = scmp.eq.s32.totalorder %s41, 0
      %p351 = por %p349, %p350
      %s352 = ssub.s32 %s43, %s50
      %p353 = scmp.eq.s32.totalorder %s352, 0
      %s355 = sadd.s32 %s354, 1
      %s356 = scalar_select %p353, %s354, %s355
      %p359 = pneg %p353
      %p360 = scmp.eq.s32.totalorder %s35, 3
      %p361 = por %p359, %p360
      %p362 = scmp.ne.s32.totalorder %s354, %s357
      %p363 = scmp.eq.s32.totalorder %s35, 0
      %p364 = por %p362, %p363
      %p365 = scmp.ne.s32.totalorder %s354, %s357
      %p366 = scmp.eq.s32.totalorder %s40, 3
      %p367 = por %p365, %p366
      %p368 = scmp.ne.s32.totalorder %s357, %s358
      %p369 = scmp.eq.s32.totalorder %s40, 0
      %p370 = por %p368, %p369
      %p371 = scmp.ne.s32.totalorder %s357, %s358
      %p372 = scmp.eq.s32.totalorder %s41, 3
      %p373 = por %p371, %p372
      %p375 = scmp.ne.s32.totalorder %s358, %s374
      %p376 = scmp.eq.s32.totalorder %s41, 0
      %p377 = por %p375, %p376
      %s378 = ssub.s32 %s42, %s54
      %p379 = scmp.eq.s32.totalorder %s378, 0
      %s381 = sadd.s32 %s380, 1
      %s382 = scalar_select %p379, %s380, %s381
      %p385 = pneg %p379
      %p386 = scmp.eq.s32.totalorder %s35, 3
      %p387 = por %p385, %p386
      %p388 = scmp.ne.s32.totalorder %s380, %s383
      %p389 = scmp.eq.s32.totalorder %s35, 0
      %p390 = por %p388, %p389
      %p391 = scmp.ne.s32.totalorder %s380, %s383
      %p392 = scmp.eq.s32.totalorder %s40, 3
      %p393 = por %p391, %p392
      %p394 = scmp.ne.s32.totalorder %s383, %s384
      %p395 = scmp.eq.s32.totalorder %s40, 0
      %p396 = por %p394, %p395
      %p397 = scmp.ne.s32.totalorder %s383, %s384
      %p398 = scmp.eq.s32.totalorder %s41, 3
      %p399 = por %p397, %p398
      %p401 = scmp.ne.s32.totalorder %s384, %s400
      %p402 = scmp.eq.s32.totalorder %s41, 0
      %p403 = por %p401, %p402
      %p404 = scmp.le.s32.totalorder 1, %s35
      %p405 = scmp.lt.s32.totalorder %s35, 5
      %p406 = pnand %p404, %p405
      %p407 = pneg %p406
      // Predicated region
      $region9: #{tpu_custom_call.1} parent=5 // pred_check
        _
      $region10: #{tpu_custom_call.1} parent=5 // pred_check_branch
        %409 = sbr.rel (%p406) target = $region12
      $region11: #{tpu_custom_call.1} parent=5 // pred_region
        %s410 = ssub.s32 %s35, 1
        // Predicated region
        $region13: #{tpu_custom_call.1} parent=11 // pred_check
          %p411 = pneg %p94
        $region14: #{tpu_custom_call.1} parent=11 // pred_check_branch
          %413 = sbr.rel (%p411) target = $region16
        $region15: #{tpu_custom_call.1} parent=11 // pred_region
          _
        $region16: #{tpu_custom_call.1} parent=11 // pred_fallthru
          _
        // Predicated region
        $region17: #{tpu_custom_call.1} parent=11 // pred_check
          %p414 = pneg %p115
        $region18: #{tpu_custom_call.1} parent=11 // pred_check_branch
          %416 = sbr.rel (%p414) target = $region20
        $region19: #{tpu_custom_call.1} parent=11 // pred_region
          %418 = vsyncadd [#allocation6], 0
          %s419 = sshll.u32 %s2, 4
          %s420 = int_to_ptr.hbm [resolvable:$true] %s419
          %s421 = sshll.u32 [#allocation5], 4
          %s422 = int_to_ptr.vmem [resolvable:$true] %s421
          %427 = dma.hbm_to_vmem [thread:$0]  %s420, 1024, %s422, [#allocation6], 64, 64, 4
        $region20: #{tpu_custom_call.1} parent=11 // pred_fallthru
          _
        // Predicated region
        $region21: #{tpu_custom_call.1} parent=11 // pred_check
          %p428 = pneg %p136
        $region22: #{tpu_custom_call.1} parent=11 // pred_check_branch
          %430 = sbr.rel (%p428) target = $region24
        $region23: #{tpu_custom_call.1} parent=11 // pred_region
          _
        $region24: #{tpu_custom_call.1} parent=11 // pred_fallthru
          _
      $region12: #{tpu_custom_call.1} parent=5 // pred_fallthru
        _
      %p431 = scmp.lt.s32.totalorder %s35, 4
      // Predicated region
      $region25: #{tpu_custom_call.1} parent=5 // pred_check
        %p432 = pneg %p431
      $region26: #{tpu_custom_call.1} parent=5 // pred_check_branch
        %434 = sbr.rel (%p432) target = $region28
      $region27: #{tpu_custom_call.1} parent=5 // pred_region
        // Predicated region
        $region29: #{tpu_custom_call.1} parent=27 // pred_check
          %p435 = pneg %p67
        $region30: #{tpu_custom_call.1} parent=27 // pred_check_branch
          %437 = sbr.rel (%p435) target = $region32
        $region31: #{tpu_custom_call.1} parent=27 // pred_region
          %p438 = scmp.lt.s32.totalorder %s42, 1
          %s439 = scalar_select %p438, %s42, 1
          %s440 = smul.addr %s439, 2
          %s441 = smul.addr %s440, 8
          %s442 = scalar_lea.vmem %s0, %s441
        $region32: #{tpu_custom_call.1} parent=27 // pred_fallthru
          _
        // Predicated region
        $region33: #{tpu_custom_call.1} parent=27 // pred_check
          %p443 = pneg %p156
        $region34: #{tpu_custom_call.1} parent=27 // pred_check_branch
          %445 = sbr.rel (%p443) target = $region36
        $region35: #{tpu_custom_call.1} parent=27 // pred_region
          %s446 = sand.u32 %s35, 1
          %s447 = scalar_lea.sflag [#allocation9], %s446
          %s448 = sand.u32 %s146, 1
          %s449 = smul.addr %s448, 192
          %s450 = scalar_lea.vmem [#allocation8], %s449
          %452 = vsyncadd %s447, 0
          %s453 = smul.addr %s43, 48
          %s454 = smul.addr %s453, 4
          %s455 = scalar_lea.hbm %s4, %s454
          %s456 = sshll.u32 %s455, 4
          %s457 = int_to_ptr.hbm [resolvable:$true] %s456
          %s458 = sshll.u32 %s450, 4
          %s459 = int_to_ptr.vmem [resolvable:$true] %s458
          %464 = dma.hbm_to_vmem [thread:$0]  %s457, 3072, %s459, %s447, 192, 192, 12
        $region36: #{tpu_custom_call.1} parent=27 // pred_fallthru
          _
        // Predicated region
        $region37: #{tpu_custom_call.1} parent=27 // pred_check
          %p465 = pneg %p182
        $region38: #{tpu_custom_call.1} parent=27 // pred_check_branch
          %467 = sbr.rel (%p465) target = $region40
        $region39: #{tpu_custom_call.1} parent=27 // pred_region
          %s468 = sand.u32 %s35, 1
          %s469 = scalar_lea.sflag [#allocation9], %s468
          %s470 = sand.u32 %s172, 1
          %s471 = smul.addr %s470, 64
          %s472 = scalar_lea.vmem [#allocation10], %s471
          %474 = vsyncadd %s469, 0
          %s475 = smul.addr %s43, 16
          %s476 = smul.addr %s475, 4
          %s477 = scalar_lea.hbm %s5, %s476
          %s478 = sshll.u32 %s477, 4
          %s479 = int_to_ptr.hbm [resolvable:$true] %s478
          %s480 = sshll.u32 %s472, 4
          %s481 = int_to_ptr.vmem [resolvable:$true] %s480
          %486 = dma.hbm_to_vmem [thread:$0]  %s479, 1024, %s481, %s469, 64, 64, 4
        $region40: #{tpu_custom_call.1} parent=27 // pred_fallthru
          _
        // Predicated region
        $region41: #{tpu_custom_call.1} parent=27 // pred_check
          %p487 = pneg %p208
        $region42: #{tpu_custom_call.1} parent=27 // pred_check_branch
          %489 = sbr.rel (%p487) target = $region44
        $region43: #{tpu_custom_call.1} parent=27 // pred_region
          %s490 = sand.u32 %s35, 1
          %s491 = scalar_lea.sflag [#allocation12], %s490
          %s492 = sand.u32 %s198, 1
          %s493 = smul.addr %s492, 64
          %s494 = scalar_lea.vmem [#allocation11], %s493
          %496 = vsyncadd %s491, 0
          %s497 = smul.addr %s43, 16
          %s498 = smul.addr %s497, 4
          %s499 = scalar_lea.hbm %s6, %s498
          %s500 = sshll.u32 %s499, 4
          %s501 = int_to_ptr.hbm [resolvable:$true] %s500
          %s502 = sshll.u32 %s494, 4
          %s503 = int_to_ptr.vmem [resolvable:$true] %s502
          %508 = dma.hbm_to_vmem [thread:$0]  %s501, 1024, %s503, %s491, 64, 64, 4
        $region44: #{tpu_custom_call.1} parent=27 // pred_fallthru
          _
        // Predicated region
        $region45: #{tpu_custom_call.1} parent=27 // pred_check
          %p509 = pneg %p234
        $region46: #{tpu_custom_call.1} parent=27 // pred_check_branch
          %511 = sbr.rel (%p509) target = $region48
        $region47: #{tpu_custom_call.1} parent=27 // pred_region
          %s512 = sand.u32 %s35, 1
          %s513 = scalar_lea.sflag [#allocation12], %s512
          %s514 = sand.u32 %s224, 1
          %s515 = smul.addr %s514, 128
          %s516 = scalar_lea.vmem [#allocation13], %s515
          %518 = vsyncadd %s513, 0
          %s519 = smul.addr %s43, 32
          %s520 = smul.addr %s519, 4
          %s521 = scalar_lea.hbm %s7, %s520
          %s522 = sshll.u32 %s521, 4
          %s523 = int_to_ptr.hbm [resolvable:$true] %s522
          %s524 = sshll.u32 %s516, 4
          %s525 = int_to_ptr.vmem [resolvable:$true] %s524
          %530 = dma.hbm_to_vmem [thread:$0]  %s523, 2048, %s525, %s513, 128, 128, 8
        $region48: #{tpu_custom_call.1} parent=27 // pred_fallthru
          _
        // Predicated region
        $region49: #{tpu_custom_call.1} parent=27 // pred_check
          %p531 = pneg %p260
        $region50: #{tpu_custom_call.1} parent=27 // pred_check_branch
          %533 = sbr.rel (%p531) target = $region52
        $region51: #{tpu_custom_call.1} parent=27 // pred_region
          %s534 = sand.u32 %s35, 1
          %s535 = scalar_lea.sflag [#allocation15], %s534
          %s536 = sand.u32 %s250, 1
          %s537 = smul.addr %s536, 64
          %s538 = scalar_lea.vmem [#allocation14], %s537
          %540 = vsyncadd %s535, 0
          %s541 = smul.addr %s43, 16
          %s542 = smul.addr %s541, 4
          %s543 = scalar_lea.hbm %s8, %s542
          %s544 = sshll.u32 %s543, 4
          %s545 = int_to_ptr.hbm [resolvable:$true] %s544
          %s546 = sshll.u32 %s538, 4
          %s547 = int_to_ptr.vmem [resolvable:$true] %s546
          %552 = dma.hbm_to_vmem [thread:$0]  %s545, 1024, %s547, %s535, 64, 64, 4
        $region52: #{tpu_custom_call.1} parent=27 // pred_fallthru
          _
        // Predicated region
        $region53: #{tpu_custom_call.1} parent=27 // pred_check
          %p553 = pneg %p286
        $region54: #{tpu_custom_call.1} parent=27 // pred_check_branch
          %555 = sbr.rel (%p553) target = $region56
        $region55: #{tpu_custom_call.1} parent=27 // pred_region
          %s556 = sand.u32 %s35, 1
          %s557 = scalar_lea.sflag [#allocation15], %s556
          %s558 = sand.u32 %s276, 1
          %s559 = smul.addr %s558, 128
          %s560 = scalar_lea.vmem [#allocation16], %s559
          %562 = vsyncadd %s557, 0
          %s563 = smul.addr %s43, 32
          %s564 = smul.addr %s563, 4
          %s565 = scalar_lea.hbm %s9, %s564
          %s566 = sshll.u32 %s565, 4
          %s567 = int_to_ptr.hbm [resolvable:$true] %s566
          %s568 = sshll.u32 %s560, 4
          %s569 = int_to_ptr.vmem [resolvable:$true] %s568
          %574 = dma.hbm_to_vmem [thread:$0]  %s567, 2048, %s569, %s557, 128, 128, 8
        $region56: #{tpu_custom_call.1} parent=27 // pred_fallthru
          _
        // Predicated region
        $region57: #{tpu_custom_call.1} parent=27 // pred_check
          %p575 = pneg %p312
        $region58: #{tpu_custom_call.1} parent=27 // pred_check_branch
          %577 = sbr.rel (%p575) target = $region60
        $region59: #{tpu_custom_call.1} parent=27 // pred_region
          %s578 = sand.u32 %s302, 1
          %s579 = scalar_lea.sflag [#allocation18], %s578
          %s580 = sand.u32 %s302, 1
          %s581 = smul.addr %s580, 128
          %s582 = scalar_lea.vmem [#allocation17], %s581
          %584 = vsyncadd %s579, 0
          %s585 = smul.addr %s43, 32
          %s586 = smul.addr %s585, 4
          %s587 = scalar_lea.hbm %s10, %s586
          %s588 = sshll.u32 %s587, 4
          %s589 = int_to_ptr.hbm [resolvable:$true] %s588
          %s590 = sshll.u32 %s582, 4
          %s591 = int_to_ptr.vmem [resolvable:$true] %s590
          %596 = dma.hbm_to_vmem [thread:$0]  %s589, 2048, %s591, %s579, 64, 64, 4
        $region60: #{tpu_custom_call.1} parent=27 // pred_fallthru
          _
        // Predicated region
        $region61: #{tpu_custom_call.1} parent=27 // pred_check
          %p597 = pneg %p338
        $region62: #{tpu_custom_call.1} parent=27 // pred_check_branch
          %599 = sbr.rel (%p597) target = $region64
        $region63: #{tpu_custom_call.1} parent=27 // pred_region
          %p600 = scmp.lt.s32.totalorder %s43, 1
          %s601 = scalar_select %p600, %s43, 1
          %s602 = smul.addr %s601, 2
          %s603 = smul.addr %s602, 8
          %s604 = scalar_lea.vmem %s11, %s603
        $region64: #{tpu_custom_call.1} parent=27 // pred_fallthru
          _
        // Predicated region
        $region65: #{tpu_custom_call.1} parent=27 // pred_check
          %p605 = pneg %p364
        $region66: #{tpu_custom_call.1} parent=27 // pred_check_branch
          %607 = sbr.rel (%p605) target = $region68
        $region67: #{tpu_custom_call.1} parent=27 // pred_region
          %p608 = scmp.lt.s32.totalorder %s43, 1
          %s609 = scalar_select %p608, %s43, 1
          %s610 = smul.addr %s609, 2
          %s611 = scalar_lea.vmem %s12, %s610
        $region68: #{tpu_custom_call.1} parent=27 // pred_fallthru
          _
      $region28: #{tpu_custom_call.1} parent=5 // pred_fallthru
        _
      %p612 = scmp.le.s32.totalorder 1, %s35
      %p613 = scmp.lt.s32.totalorder %s35, 5
      %p614 = pnand %p612, %p613
      %p615 = pneg %p614
      // Predicated region
      $region69: #{tpu_custom_call.1} parent=5 // pred_check
        _
      $region70: #{tpu_custom_call.1} parent=5 // pred_check_branch
        %617 = sbr.rel (%p614) target = $region72
      $region71: #{tpu_custom_call.1} parent=5 // pred_region
        %s618 = ssub.s32 %s35, 1
        // Predicated region
        $region73: #{tpu_custom_call.1} parent=71 // pred_check
          %p619 = pneg %p115
        $region74: #{tpu_custom_call.1} parent=71 // pred_check_branch
          %621 = sbr.rel (%p619) target = $region76
        $region75: #{tpu_custom_call.1} parent=71 // pred_region
          %623 = dma.done [#allocation6], 1024
        $region76: #{tpu_custom_call.1} parent=71 // pred_fallthru
          _
        %s624 = sand.u32 %s40, 1
        %s625 = scalar_lea.sflag [#allocation9], %s624
        %s626 = sand.u32 %s149, 1
        %s627 = smul.addr %s626, 192
        %s628 = scalar_lea.vmem [#allocation8], %s627
        // Predicated region
        $region77: #{tpu_custom_call.1} parent=71 // pred_check
          %p629 = pneg %p162
        $region78: #{tpu_custom_call.1} parent=71 // pred_check_branch
          %631 = sbr.rel (%p629) target = $region80
        $region79: #{tpu_custom_call.1} parent=71 // pred_region
          %633 = dma.done %s625, 3072
        $region80: #{tpu_custom_call.1} parent=71 // pred_fallthru
          _
        %s634 = sand.u32 %s40, 1
        %s635 = scalar_lea.sflag [#allocation9], %s634
        %s636 = sand.u32 %s175, 1
        %s637 = smul.addr %s636, 64
        %s638 = scalar_lea.vmem [#allocation10], %s637
        // Predicated region
        $region81: #{tpu_custom_call.1} parent=71 // pred_check
          %p639 = pneg %p188
        $region82: #{tpu_custom_call.1} parent=71 // pred_check_branch
          %641 = sbr.rel (%p639) target = $region84
        $region83: #{tpu_custom_call.1} parent=71 // pred_region
          %643 = dma.done %s635, 1024
        $region84: #{tpu_custom_call.1} parent=71 // pred_fallthru
          _
        %s644 = sand.u32 %s40, 1
        %s645 = scalar_lea.sflag [#allocation12], %s644
        %s646 = sand.u32 %s201, 1
        %s647 = smul.addr %s646, 64
        %s648 = scalar_lea.vmem [#allocation11], %s647
        // Predicated region
        $region85: #{tpu_custom_call.1} parent=71 // pred_check
          %p649 = pneg %p214
        $region86: #{tpu_custom_call.1} parent=71 // pred_check_branch
          %651 = sbr.rel (%p649) target = $region88
        $region87: #{tpu_custom_call.1} parent=71 // pred_region
          %653 = dma.done %s645, 1024
        $region88: #{tpu_custom_call.1} parent=71 // pred_fallthru
          _
        %s654 = sand.u32 %s40, 1
        %s655 = scalar_lea.sflag [#allocation12], %s654
        %s656 = sand.u32 %s227, 1
        %s657 = smul.addr %s656, 128
        %s658 = scalar_lea.vmem [#allocation13], %s657
        // Predicated region
        $region89: #{tpu_custom_call.1} parent=71 // pred_check
          %p659 = pneg %p240
        $region90: #{tpu_custom_call.1} parent=71 // pred_check_branch
          %661 = sbr.rel (%p659) target = $region92
        $region91: #{tpu_custom_call.1} parent=71 // pred_region
          %663 = dma.done %s655, 2048
        $region92: #{tpu_custom_call.1} parent=71 // pred_fallthru
          _
        %s664 = sand.u32 %s40, 1
        %s665 = scalar_lea.sflag [#allocation15], %s664
        %s666 = sand.u32 %s253, 1
        %s667 = smul.addr %s666, 64
        %s668 = scalar_lea.vmem [#allocation14], %s667
        // Predicated region
        $region93: #{tpu_custom_call.1} parent=71 // pred_check
          %p669 = pneg %p266
        $region94: #{tpu_custom_call.1} parent=71 // pred_check_branch
          %671 = sbr.rel (%p669) target = $region96
        $region95: #{tpu_custom_call.1} parent=71 // pred_region
          %673 = dma.done %s665, 1024
        $region96: #{tpu_custom_call.1} parent=71 // pred_fallthru
          _
        %s674 = sand.u32 %s40, 1
        %s675 = scalar_lea.sflag [#allocation15], %s674
        %s676 = sand.u32 %s279, 1
        %s677 = smul.addr %s676, 128
        %s678 = scalar_lea.vmem [#allocation16], %s677
        // Predicated region
        $region97: #{tpu_custom_call.1} parent=71 // pred_check
          %p679 = pneg %p292
        $region98: #{tpu_custom_call.1} parent=71 // pred_check_branch
          %681 = sbr.rel (%p679) target = $region100
        $region99: #{tpu_custom_call.1} parent=71 // pred_region
          %683 = dma.done %s675, 2048
        $region100: #{tpu_custom_call.1} parent=71 // pred_fallthru
          _
        %s684 = sand.u32 %s305, 1
        %s685 = scalar_lea.sflag [#allocation18], %s684
        %s686 = sand.u32 %s305, 1
        %s687 = smul.addr %s686, 128
        %s688 = scalar_lea.vmem [#allocation17], %s687
        // Predicated region
        $region101: #{tpu_custom_call.1} parent=71 // pred_check
          %p689 = pneg %p318
        $region102: #{tpu_custom_call.1} parent=71 // pred_check_branch
          %691 = sbr.rel (%p689) target = $region104
        $region103: #{tpu_custom_call.1} parent=71 // pred_region
          %693 = dma.done %s685, 2048
        $region104: #{tpu_custom_call.1} parent=71 // pred_fallthru
          _
        %p694 = scmp.lt.s32.totalorder %s44, 1
        %s695 = scalar_select %p694, %s44, 1
        %s696 = smul.addr %s695, 2
        %s697 = smul.addr %s696, 8
        %s698 = scalar_lea.vmem %s0, %s697
        %p699 = pneg %p73
        %p700 = pneg %p70
        %p701 = pneg %p94
        %p702 = pneg %p91
        %p703 = pneg %p115
        %p704 = pneg %p112
        %p705 = pneg %p136
        %p706 = pneg %p133
        %s707 = sand.u32 %s40, 1
        %s708 = scalar_lea.sflag [#allocation9], %s707
        %s709 = sand.u32 %s149, 1
        %s710 = smul.addr %s709, 192
        %s711 = scalar_lea.vmem [#allocation8], %s710
        %p712 = pneg %p162
        %p713 = pneg %p159
        %s714 = sand.u32 %s40, 1
        %s715 = scalar_lea.sflag [#allocation9], %s714
        %s716 = sand.u32 %s175, 1
        %s717 = smul.addr %s716, 64
        %s718 = scalar_lea.vmem [#allocation10], %s717
        %p719 = pneg %p188
        %p720 = pneg %p185
        %s721 = sand.u32 %s40, 1
        %s722 = scalar_lea.sflag [#allocation12], %s721
        %s723 = sand.u32 %s201, 1
        %s724 = smul.addr %s723, 64
        %s725 = scalar_lea.vmem [#allocation11], %s724
        %p726 = pneg %p214
        %p727 = pneg %p211
        %s728 = sand.u32 %s40, 1
        %s729 = scalar_lea.sflag [#allocation12], %s728
        %s730 = sand.u32 %s227, 1
        %s731 = smul.addr %s730, 128
        %s732 = scalar_lea.vmem [#allocation13], %s731
        %p733 = pneg %p240
        %p734 = pneg %p237
        %s735 = sand.u32 %s40, 1
        %s736 = scalar_lea.sflag [#allocation15], %s735
        %s737 = sand.u32 %s253, 1
        %s738 = smul.addr %s737, 64
        %s739 = scalar_lea.vmem [#allocation14], %s738
        %p740 = pneg %p266
        %p741 = pneg %p263
        %s742 = sand.u32 %s40, 1
        %s743 = scalar_lea.sflag [#allocation15], %s742
        %s744 = sand.u32 %s279, 1
        %s745 = smul.addr %s744, 128
        %s746 = scalar_lea.vmem [#allocation16], %s745
        %p747 = pneg %p292
        %p748 = pneg %p289
        %s749 = sand.u32 %s305, 1
        %s750 = scalar_lea.sflag [#allocation18], %s749
        %s751 = sand.u32 %s305, 1
        %s752 = smul.addr %s751, 128
        %s753 = scalar_lea.vmem [#allocation17], %s752
        %p754 = pneg %p318
        %p755 = pneg %p315
        %p756 = scmp.lt.s32.totalorder %s45, 1
        %s757 = scalar_select %p756, %s45, 1
        %s758 = smul.addr %s757, 2
        %s759 = smul.addr %s758, 8
        %s760 = scalar_lea.vmem %s11, %s759
        %p761 = pneg %p344
        %p762 = pneg %p341
        %p763 = scmp.lt.s32.totalorder %s45, 1
        %s764 = scalar_select %p763, %s45, 1
        %s765 = smul.addr %s764, 2
        %s766 = scalar_lea.vmem %s12, %s765
        %p767 = pneg %p370
        %p768 = pneg %p367
        %p769 = pneg %p396
        %p770 = pneg %p393
        %s771 = sand.u32 %s383, 1
        %s772 = scalar_lea.sflag [#allocation7], %s771
        %s773 = sand.u32 %s383, 1
        %s774 = smul.addr %s773, 16
        %s775 = scalar_lea.vmem [#allocation19], %s774
        %p776 = scmp.lt.s32.totalorder %s44, 1
        %s777 = scalar_select %p776, %s44, 1
        %s778 = smul.addr %s777, 2
        %s779 = smul.addr %s778, 8
        %s780 = scalar_lea.vmem %s0, %s779
        %p781 = scmp.lt.s32.totalorder %s45, 1
        %s782 = scalar_select %p781, %s45, 1
        %s783 = smul.addr %s782, 2
        %s784 = smul.addr %s783, 8
        %s785 = scalar_lea.vmem %s11, %s784
        %p786 = scmp.lt.s32.totalorder %s45, 1
        %s787 = scalar_select %p786, %s45, 1
        %s788 = smul.addr %s787, 2
        %s789 = scalar_lea.vmem %s12, %s788
        %p791 = scmp.eq.s32.totalorder %s45, 0
        // Predicated region
        $region105: #{tpu_custom_call.1} parent=71 // pred_check
          %p792 = pneg %p791
        $region106: #{tpu_custom_call.1} parent=71 // pred_check_branch
          %794 = sbr.rel (%p792) target = $region108
        $region107: #{tpu_custom_call.1} parent=71 // pred_region
          %v795 = vld [vmem:[%s780] sm:$0xff]
          %v796 = vld [vmem:[%s780 + $0x8] sm:$0xff]
          %v797 = vpack.c.bf16 %v796, %v795
          %v798 = vld [vmem:[#allocation5] sm:$0xf]
          %v799 = vld [vmem:[#allocation5 + $0x4] sm:$0xf]
          %v800 = vld [vmem:[#allocation5 + $0x8] sm:$0xf]
          %v801 = vld [vmem:[#allocation5 + $0xc] sm:$0xf]
          %v802 = vld [vmem:[#allocation5 + $0x10] sm:$0xf]
          %v803 = vld [vmem:[#allocation5 + $0x14] sm:$0xf]
          %v804 = vld [vmem:[#allocation5 + $0x18] sm:$0xf]
          %v805 = vld [vmem:[#allocation5 + $0x1c] sm:$0xf]
          %v806 = vld [vmem:[#allocation5 + $0x20] sm:$0xf]
          %v807 = vld [vmem:[#allocation5 + $0x24] sm:$0xf]
          %v808 = vld [vmem:[#allocation5 + $0x28] sm:$0xf]
          %v809 = vld [vmem:[#allocation5 + $0x2c] sm:$0xf]
          %v810 = vld [vmem:[#allocation5 + $0x30] sm:$0xf]
          %v811 = vld [vmem:[#allocation5 + $0x34] sm:$0xf]
          %v812 = vld [vmem:[#allocation5 + $0x38] sm:$0xf]
          %v813 = vld [vmem:[#allocation5 + $0x3c] sm:$0xf]
          %v814 = vld [vmem:[%s3] sm:$0x1]
          %v816 = vperm.slane %v814, 0
          %v834 = vunpack.c.l.b16 %v798
          %v835 = vunpack.c.l.b16 %v799
          %v836 = vunpack.c.l.b16 %v800
          %v837 = vunpack.c.l.b16 %v801
          %v838 = vunpack.c.l.b16 %v802
          %v839 = vunpack.c.l.b16 %v803
          %v840 = vunpack.c.l.b16 %v804
          %v841 = vunpack.c.l.b16 %v805
          %v842 = vunpack.c.l.b16 %v806
          %v843 = vunpack.c.l.b16 %v807
          %v844 = vunpack.c.l.b16 %v808
          %v845 = vunpack.c.l.b16 %v809
          %v846 = vunpack.c.l.b16 %v810
          %v847 = vunpack.c.l.b16 %v811
          %v848 = vunpack.c.l.b16 %v812
          %v849 = vunpack.c.l.b16 %v813
          %v850 = vpack.c.b16 %v835, %v834
          %v851 = vpack.c.b16 %v837, %v836
          %v852 = vpack.c.b16 %v839, %v838
          %v853 = vpack.c.b16 %v841, %v840
          %v854 = vpack.c.b16 %v843, %v842
          %v855 = vpack.c.b16 %v845, %v844
          %v856 = vpack.c.b16 %v847, %v846
          %v857 = vpack.c.b16 %v849, %v848
          %866 = vmatpush.bf16.msra.mxu0 %v857
          %867 = vmatpush.bf16.msra.mxu0 %v856
          %868 = vmatpush.bf16.msra.mxu0 %v855
          %869 = vmatpush.bf16.msra.mxu0 %v854
          %870 = vmatpush.bf16.msra.mxu0 %v853
          %871 = vmatpush.bf16.msra.mxu0 %v852
          %872 = vmatpush.bf16.msra.mxu0 %v851
          %873 = vmatpush.bf16.msra.mxu0 %v850
          %874 = vmatmul.bf16.gmra.mxu0 %v797
          %v875 = vpop.f32.mrf.mxu0
          %v876 = vadd.f32 %v816, %v875
          %v877 = vpop.f32.mrf.mxu0
          %v878 = vadd.f32 %v816, %v877
          %879 = vdwg.mxu0
          %880 = vst [vmem:[#allocation2] sm:$0xff] %v876
          %881 = vst [vmem:[#allocation2 + $0x8] sm:$0xff] %v878
          %v882 = vld [vmem:[%s1] sm:$0xff]
          %v883 = vld [vmem:[%s1 + $0x8] sm:$0xff]
          %884 = vst [vmem:[#allocation3] sm:$0xff] %v882
          %885 = vst [vmem:[#allocation3 + $0x8] sm:$0xff] %v883
        $region108: #{tpu_custom_call.1} parent=71 // pred_fallthru
          _
        %v886 = vld [vmem:[%s785] sm:$0xff]
        %v887 = vld [vmem:[%s785 + $0x8] sm:$0x7f]
        %v888 = vld [vmem:[#allocation3] sm:$0xff]
        %v889 = vld [vmem:[#allocation3 + $0x8] sm:$0xff]
        %v890 = vld [vmem:[#allocation2] sm:$0xff]
        %v891 = vld [vmem:[#allocation2 + $0x8] sm:$0xff]
        %v892 = vpack.c.bf16 %v891, %v890
        %v893 = vpack.c.bf16 %v889, %v888
        %v894 = vld [vmem:[%s628] sm:$0xff]
        %v895 = vld [vmem:[%s628 + $0x8] sm:$0xf]
        %v896 = vld [vmem:[%s628 + $0xc] sm:$0xff]
        %v897 = vld [vmem:[%s628 + $0x14] sm:$0xf]
        %v898 = vld [vmem:[%s628 + $0x18] sm:$0xff]
        %v899 = vld [vmem:[%s628 + $0x20] sm:$0xf]
        %v900 = vld [vmem:[%s628 + $0x24] sm:$0xff]
        %v901 = vld [vmem:[%s628 + $0x2c] sm:$0xf]
        %v902 = vld [vmem:[%s628 + $0x30] sm:$0xff]
        %v903 = vld [vmem:[%s628 + $0x38] sm:$0xf]
        %v904 = vld [vmem:[%s628 + $0x3c] sm:$0xff]
        %v905 = vld [vmem:[%s628 + $0x44] sm:$0xf]
        %v906 = vld [vmem:[%s628 + $0x48] sm:$0xff]
        %v907 = vld [vmem:[%s628 + $0x50] sm:$0xf]
        %v908 = vld [vmem:[%s628 + $0x54] sm:$0xff]
        %v909 = vld [vmem:[%s628 + $0x5c] sm:$0xf]
        %v910 = vld [vmem:[%s628 + $0x60] sm:$0xff]
        %v911 = vld [vmem:[%s628 + $0x68] sm:$0xf]
        %v912 = vld [vmem:[%s628 + $0x6c] sm:$0xff]
        %v913 = vld [vmem:[%s628 + $0x74] sm:$0xf]
        %v914 = vld [vmem:[%s628 + $0x78] sm:$0xff]
        %v915 = vld [vmem:[%s628 + $0x80] sm:$0xf]
        %v916 = vld [vmem:[%s628 + $0x84] sm:$0xff]
        %v917 = vld [vmem:[%s628 + $0x8c] sm:$0xf]
        %v918 = vld [vmem:[%s628 + $0x90] sm:$0xff]
        %v919 = vld [vmem:[%s628 + $0x98] sm:$0xf]
        %v920 = vld [vmem:[%s628 + $0x9c] sm:$0xff]
        %v921 = vld [vmem:[%s628 + $0xa4] sm:$0xf]
        %v922 = vld [vmem:[%s628 + $0xa8] sm:$0xff]
        %v923 = vld [vmem:[%s628 + $0xb0] sm:$0xf]
        %v924 = vld [vmem:[%s628 + $0xb4] sm:$0xff]
        %v925 = vld [vmem:[%s628 + $0xbc] sm:$0xf]
        %v958 = vunpack.c.l.b16 %v894
        %v959 = vunpack.c.h.b16 %v894
        %v960 = vunpack.c.l.b16 %v895
        %v961 = vunpack.c.l.b16 %v896
        %v962 = vunpack.c.h.b16 %v896
        %v963 = vunpack.c.l.b16 %v897
        %v964 = vunpack.c.l.b16 %v898
        %v965 = vunpack.c.h.b16 %v898
        %v966 = vunpack.c.l.b16 %v899
        %v967 = vunpack.c.l.b16 %v900
        %v968 = vunpack.c.h.b16 %v900
        %v969 = vunpack.c.l.b16 %v901
        %v970 = vunpack.c.l.b16 %v902
        %v971 = vunpack.c.h.b16 %v902
        %v972 = vunpack.c.l.b16 %v903
        %v973 = vunpack.c.l.b16 %v904
        %v974 = vunpack.c.h.b16 %v904
        %v975 = vunpack.c.l.b16 %v905
        %v976 = vunpack.c.l.b16 %v906
        %v977 = vunpack.c.h.b16 %v906
        %v978 = vunpack.c.l.b16 %v907
        %v979 = vunpack.c.l.b16 %v908
        %v980 = vunpack.c.h.b16 %v908
        %v981 = vunpack.c.l.b16 %v909
        %v982 = vunpack.c.l.b16 %v910
        %v983 = vunpack.c.h.b16 %v910
        %v984 = vunpack.c.l.b16 %v911
        %v985 = vunpack.c.l.b16 %v912
        %v986 = vunpack.c.h.b16 %v912
        %v987 = vunpack.c.l.b16 %v913
        %v988 = vunpack.c.l.b16 %v914
        %v989 = vunpack.c.h.b16 %v914
        %v990 = vunpack.c.l.b16 %v915
        %v991 = vunpack.c.l.b16 %v916
        %v992 = vunpack.c.h.b16 %v916
        %v993 = vunpack.c.l.b16 %v917
        %v994 = vunpack.c.l.b16 %v918
        %v995 = vunpack.c.h.b16 %v918
        %v996 = vunpack.c.l.b16 %v919
        %v997 = vunpack.c.l.b16 %v920
        %v998 = vunpack.c.h.b16 %v920
        %v999 = vunpack.c.l.b16 %v921
        %v1000 = vunpack.c.l.b16 %v922
        %v1001 = vunpack.c.h.b16 %v922
        %v1002 = vunpack.c.l.b16 %v923
        %v1003 = vunpack.c.l.b16 %v924
        %v1004 = vunpack.c.h.b16 %v924
        %v1005 = vunpack.c.l.b16 %v925
        %v1006 = vpack.c.b16 %v961, %v958
        %v1007 = vpack.c.b16 %v962, %v959
        %v1008 = vpack.c.b16 %v963, %v960
        %v1009 = vpack.c.b16 %v967, %v964
        %v1010 = vpack.c.b16 %v968, %v965
        %v1011 = vpack.c.b16 %v969, %v966
        %v1012 = vpack.c.b16 %v973, %v970
        %v1013 = vpack.c.b16 %v974, %v971
        %v1014 = vpack.c.b16 %v975, %v972
        %v1015 = vpack.c.b16 %v979, %v976
        %v1016 = vpack.c.b16 %v980, %v977
        %v1017 = vpack.c.b16 %v981, %v978
        %v1018 = vpack.c.b16 %v985, %v982
        %v1019 = vpack.c.b16 %v986, %v983
        %v1020 = vpack.c.b16 %v987, %v984
        %v1021 = vpack.c.b16 %v991, %v988
        %v1022 = vpack.c.b16 %v992, %v989
        %v1023 = vpack.c.b16 %v993, %v990
        %v1024 = vpack.c.b16 %v997, %v994
        %v1025 = vpack.c.b16 %v998, %v995
        %v1026 = vpack.c.b16 %v999, %v996
        %v1027 = vpack.c.b16 %v1003, %v1000
        %v1028 = vpack.c.b16 %v1004, %v1001
        %v1029 = vpack.c.b16 %v1005, %v1002
        %1054 = vmatpush.bf16.msra.mxu0 %v1027
        %1055 = vmatpush.bf16.msra.mxu0 %v1024
        %1056 = vmatpush.bf16.msra.mxu0 %v1021
        %1057 = vmatpush.bf16.msra.mxu0 %v1018
        %1058 = vmatpush.bf16.msra.mxu0 %v1015
        %1059 = vmatpush.bf16.msra.mxu0 %v1012
        %1060 = vmatpush.bf16.msra.mxu0 %v1009
        %1061 = vmatpush.bf16.msra.mxu0 %v1006
        %1062 = vmatmul.bf16.gmra.mxu0 %v893
        %v1063 = vpop.f32.mrf.mxu0
        %v1064 = vadd.f32 0.0, %v1063
        %v1065 = vpop.f32.mrf.mxu0
        %v1066 = vadd.f32 0.0, %v1065
        %1067 = vdwg.mxu0
        %1068 = vmatpush.bf16.msra.mxu0 %v1028
        %1069 = vmatpush.bf16.msra.mxu0 %v1025
        %1070 = vmatpush.bf16.msra.mxu0 %v1022
        %1071 = vmatpush.bf16.msra.mxu0 %v1019
        %1072 = vmatpush.bf16.msra.mxu0 %v1016
        %1073 = vmatpush.bf16.msra.mxu0 %v1013
        %1074 = vmatpush.bf16.msra.mxu0 %v1010
        %1075 = vmatpush.bf16.msra.mxu0 %v1007
        %1076 = vmatmul.bf16.gmra.mxu0 %v893
        %v1077 = vpop.f32.mrf.mxu0
        %v1078 = vadd.f32 0.0, %v1077
        %v1079 = vpop.f32.mrf.mxu0
        %v1080 = vadd.f32 0.0, %v1079
        %1081 = vdwg.mxu0
        %1082 = vmatpush.bf16.msra.mxu0 %v1029
        %1083 = vmatpush.bf16.msra.mxu0 %v1026
        %1084 = vmatpush.bf16.msra.mxu0 %v1023
        %1085 = vmatpush.bf16.msra.mxu0 %v1020
        %1086 = vmatpush.bf16.msra.mxu0 %v1017
        %1087 = vmatpush.bf16.msra.mxu0 %v1014
        %1088 = vmatpush.bf16.msra.mxu0 %v1011
        %1089 = vmatpush.bf16.msra.mxu0 %v1008
        %1090 = vmatmul.bf16.gmra.mxu0 %v893
        %v1091 = vpop.f32.mrf.mxu0
        %v1092 = vadd.f32 0.0, %v1091
        %v1093 = vpop.f32.mrf.mxu0
        %v1094 = vadd.f32 0.0, %v1093
        %1095 = vdwg.mxu0
        %v1096 = vperm.slane %v886, 0
        %v1097 = vadd.f32 %v1064, %v1096
        %v1098 = vadd.f32 %v1066, %v1096
        %v1099 = vmul.f32 %v1097, 0.125
        %v1100 = vmul.f32 %v1098, 0.125
        %v1101 = vperm.slane %v886, 1
        %v1102 = vadd.f32 %v1078, %v1101
        %v1103 = vadd.f32 %v1080, %v1101
        %v1104 = vperm.slane %v886, 2
        %v1105 = vadd.f32 %v1092, %v1104
        %v1106 = vadd.f32 %v1094, %v1104
        %v1107 = vpack.c.bf16 %v1100, %v1099
        %v1108 = vpack.c.bf16 %v1103, %v1102
        %v1109 = vpack.c.bf16 %v1106, %v1105
        %vm1110 = vcmask 523264
        %v1112 = vsel %vm1110, %v1107, 0
        %v1115 = vsel %vm1110, %v1108, 0
        %1117 = vmatpush.bf16.xpose.msra.mxu0 0
        %1118 = vmatpush.bf16.xpose.msra.mxu0 0
        %1119 = vmatpush.bf16.xpose.msra.mxu0 0
        %1120 = vmatpush.bf16.xpose.msra.mxu0 0
        %1121 = vmatpush.bf16.xpose.msra.mxu0 0
        %1122 = vmatpush.bf16.xpose.msra.mxu0 0
        %1123 = vmatpush.bf16.xpose.msra.mxu0 0
        %1124 = vmatpush.bf16.xpose.msra.mxu0 %v1115
        %1125 = vmatmul.bf16.gmra.mxu0 %v1112
        %v1126 = vpop.f32.mrf.mxu0
        %v1127 = vadd.f32 0.0, %v1126
        %v1128 = vpop.f32.mrf.mxu0
        %v1129 = vadd.f32 0.0, %v1128
        %1130 = vdwg.mxu0
        %vm1131 = vcmask 130048
        %v1132 = vsel %vm1131, %v1127, -inf
        %1133 = vmax.xlane.f32.xlu0 %v1132
        %v1134 = vpop.xlane.xlu0 %1133
        %v1135 = vsel %vm1131, %v1129, -inf
        %1136 = vmax.xlane.f32.xlu0 %v1135
        %v1137 = vpop.xlane.xlu0 %1136
        %v1138 = vsub.f32 %v1127, %v1134
        %v1139 = vsub.f32 %v1129, %v1137
        %v1140 = vmul.f32 %v1138, 1.442695
        %v1141 = vpow.pop %v1140
        %v1142 = vmul.f32 %v1139, 1.442695
        %v1143 = vpow.pop %v1142
        %v1144 = vsel %vm1131, %v1141, 0.0
        %1145 = vadd.xlane.f32.xlu0 %v1144
        %v1146 = vpop.xlane.xlu0 %1145
        %v1147 = vsel %vm1131, %v1143, 0.0
        %1148 = vadd.xlane.f32.xlu0 %v1147
        %v1149 = vpop.xlane.xlu0 %1148
        %v1150 = vrcp.pop %v1146
        %v1151 = vrcp.pop %v1149
        %v1152 = vmul.f32 %v1141, %v1150
        %v1153 = vmul.f32 %v1143, %v1151
        %v1154 = vpack.c.bf16 %v1153, %v1152
        %v1156 = vsel %vm1131, %v1154, 0
        %1158 = vmatpush.bf16.msra.mxu0 0
        %1159 = vmatpush.bf16.msra.mxu0 0
        %1160 = vmatpush.bf16.msra.mxu0 0
        %1161 = vmatpush.bf16.msra.mxu0 0
        %1162 = vmatpush.bf16.msra.mxu0 0
        %1163 = vmatpush.bf16.msra.mxu0 0
        %1164 = vmatpush.bf16.msra.mxu0 0
        %1165 = vmatpush.bf16.msra.mxu0 %v1109
        %1166 = vmatmul.bf16.gmra.mxu0 %v1156
        %v1167 = vpop.f32.mrf.mxu0
        %v1168 = vadd.f32 0.0, %v1167
        %v1169 = vpop.f32.mrf.mxu0
        %v1170 = vadd.f32 0.0, %v1169
        %1171 = vdwg.mxu0
        %v1172 = vpack.c.bf16 %v1168, %v1168
        %v1173 = vpack.c.bf16 %v1170, %v1170
        %vm1174 = vcmask 519168
        %1175 = vst.msk [vmem:[#allocation4] sm:$0xf] %vm1174, %v1172
        %1176 = vst.msk [vmem:[#allocation4 + $0x4] sm:$0xf] %vm1174, %v1173
        %1178 = vrot.lane.b32.xlu0 %v1107, 64
        %v1179 = vpop.permute.xlu0 %1178
        %1181 = vrot.lane.b32.xlu0 %v1108, 64
        %v1182 = vpop.permute.xlu0 %1181
        %v1184 = vsel %vm1110, %v1179, 0
        %v1187 = vsel %vm1110, %v1182, 0
        %1189 = vmatpush.bf16.xpose.msra.mxu0 0
        %1190 = vmatpush.bf16.xpose.msra.mxu0 0
        %1191 = vmatpush.bf16.xpose.msra.mxu0 0
        %1192 = vmatpush.bf16.xpose.msra.mxu0 0
        %1193 = vmatpush.bf16.xpose.msra.mxu0 0
        %1194 = vmatpush.bf16.xpose.msra.mxu0 0
        %1195 = vmatpush.bf16.xpose.msra.mxu0 0
        %1196 = vmatpush.bf16.xpose.msra.mxu0 %v1187
        %1197 = vmatmul.bf16.gmra.mxu0 %v1184
        %v1198 = vpop.f32.mrf.mxu0
        %v1199 = vadd.f32 0.0, %v1198
        %v1200 = vpop.f32.mrf.mxu0
        %v1201 = vadd.f32 0.0, %v1200
        %1202 = vdwg.mxu0
        %v1203 = vsel %vm1131, %v1199, -inf
        %1204 = vmax.xlane.f32.xlu0 %v1203
        %v1205 = vpop.xlane.xlu0 %1204
        %v1206 = vsel %vm1131, %v1201, -inf
        %1207 = vmax.xlane.f32.xlu0 %v1206
        %v1208 = vpop.xlane.xlu0 %1207
        %v1209 = vsub.f32 %v1199, %v1205
        %v1210 = vsub.f32 %v1201, %v1208
        %v1211 = vmul.f32 %v1209, 1.442695
        %v1212 = vpow.pop %v1211
        %v1213 = vmul.f32 %v1210, 1.442695
        %v1214 = vpow.pop %v1213
        %v1215 = vsel %vm1131, %v1212, 0.0
        %1216 = vadd.xlane.f32.xlu0 %v1215
        %v1217 = vpop.xlane.xlu0 %1216
        %v1218 = vsel %vm1131, %v1214, 0.0
        %1219 = vadd.xlane.f32.xlu0 %v1218
        %v1220 = vpop.xlane.xlu0 %1219
        %v1221 = vrcp.pop %v1217
        %v1222 = vrcp.pop %v1220
        %v1223 = vmul.f32 %v1212, %v1221
        %v1224 = vmul.f32 %v1214, %v1222
        %v1225 = vpack.c.bf16 %v1224, %v1223
        %1227 = vrot.lane.b32.xlu0 %v1109, 64
        %v1228 = vpop.permute.xlu0 %1227
        %v1231 = vsel %vm1131, %v1225, 0
        %1233 = vmatpush.bf16.msra.mxu0 0
        %1234 = vmatpush.bf16.msra.mxu0 0
        %1235 = vmatpush.bf16.msra.mxu0 0
        %1236 = vmatpush.bf16.msra.mxu0 0
        %1237 = vmatpush.bf16.msra.mxu0 0
        %1238 = vmatpush.bf16.msra.mxu0 0
        %1239 = vmatpush.bf16.msra.mxu0 0
        %1240 = vmatpush.bf16.msra.mxu0 %v1228
        %1241 = vmatmul.bf16.gmra.mxu0 %v1231
        %v1242 = vpop.f32.mrf.mxu0
        %v1243 = vadd.f32 0.0, %v1242
        %v1244 = vpop.f32.mrf.mxu0
        %v1245 = vadd.f32 0.0, %v1244
        %1246 = vdwg.mxu0
        %v1247 = vpack.c.bf16 %v1243, %v1243
        %v1248 = vpack.c.bf16 %v1245, %v1245
        %1251 = vrot.lane.b32.xlu0 %v1247, 64
        %v1252 = vpop.permute.xlu0 %1251
        %1253 = vrot.lane.b32.xlu0 %v1248, 64
        %v1254 = vpop.permute.xlu0 %1253
        %vm1257 = vcmask 1043968
        %1258 = vst.msk [vmem:[#allocation4] sm:$0xf] %vm1257, %v1252
        %1259 = vst.msk [vmem:[#allocation4 + $0x4] sm:$0xf] %vm1257, %v1254
        %v1260 = vld [vmem:[#allocation4] sm:$0xf]
        %v1261 = vld [vmem:[#allocation4 + $0x4] sm:$0xf]
        %v1262 = vld [vmem:[%s638] sm:$0xf]
        %v1263 = vld [vmem:[%s638 + $0x4] sm:$0xf]
        %v1264 = vld [vmem:[%s638 + $0x8] sm:$0xf]
        %v1265 = vld [vmem:[%s638 + $0xc] sm:$0xf]
        %v1266 = vld [vmem:[%s638 + $0x10] sm:$0xf]
        %v1267 = vld [vmem:[%s638 + $0x14] sm:$0xf]
        %v1268 = vld [vmem:[%s638 + $0x18] sm:$0xf]
        %v1269 = vld [vmem:[%s638 + $0x1c] sm:$0xf]
        %v1270 = vld [vmem:[%s638 + $0x20] sm:$0xf]
        %v1271 = vld [vmem:[%s638 + $0x24] sm:$0xf]
        %v1272 = vld [vmem:[%s638 + $0x28] sm:$0xf]
        %v1273 = vld [vmem:[%s638 + $0x2c] sm:$0xf]
        %v1274 = vld [vmem:[%s638 + $0x30] sm:$0xf]
        %v1275 = vld [vmem:[%s638 + $0x34] sm:$0xf]
        %v1276 = vld [vmem:[%s638 + $0x38] sm:$0xf]
        %v1277 = vld [vmem:[%s638 + $0x3c] sm:$0xf]
        %v1278 = vperm.slane %v886, 3
        %v1281 = vunpack.c.l.b16 %v1260
        %v1282 = vunpack.c.l.b16 %v1261
        %v1283 = vpack.c.b16 %v1282, %v1281
        %v1301 = vunpack.c.l.b16 %v1262
        %v1302 = vunpack.c.l.b16 %v1263
        %v1303 = vunpack.c.l.b16 %v1264
        %v1304 = vunpack.c.l.b16 %v1265
        %v1305 = vunpack.c.l.b16 %v1266
        %v1306 = vunpack.c.l.b16 %v1267
        %v1307 = vunpack.c.l.b16 %v1268
        %v1308 = vunpack.c.l.b16 %v1269
        %v1309 = vunpack.c.l.b16 %v1270
        %v1310 = vunpack.c.l.b16 %v1271
        %v1311 = vunpack.c.l.b16 %v1272
        %v1312 = vunpack.c.l.b16 %v1273
        %v1313 = vunpack.c.l.b16 %v1274
        %v1314 = vunpack.c.l.b16 %v1275
        %v1315 = vunpack.c.l.b16 %v1276
        %v1316 = vunpack.c.l.b16 %v1277
        %v1317 = vpack.c.b16 %v1302, %v1301
        %v1318 = vpack.c.b16 %v1304, %v1303
        %v1319 = vpack.c.b16 %v1306, %v1305
        %v1320 = vpack.c.b16 %v1308, %v1307
        %v1321 = vpack.c.b16 %v1310, %v1309
        %v1322 = vpack.c.b16 %v1312, %v1311
        %v1323 = vpack.c.b16 %v1314, %v1313
        %v1324 = vpack.c.b16 %v1316, %v1315
        %1333 = vmatpush.bf16.msra.mxu0 %v1324
        %1334 = vmatpush.bf16.msra.mxu0 %v1323
        %1335 = vmatpush.bf16.msra.mxu0 %v1322
        %1336 = vmatpush.bf16.msra.mxu0 %v1321
        %1337 = vmatpush.bf16.msra.mxu0 %v1320
        %1338 = vmatpush.bf16.msra.mxu0 %v1319
        %1339 = vmatpush.bf16.msra.mxu0 %v1318
        %1340 = vmatpush.bf16.msra.mxu0 %v1317
        %1341 = vmatmul.bf16.gmra.mxu0 %v1283
        %v1342 = vpop.f32.mrf.mxu0
        %v1343 = vadd.f32 %v1278, %v1342
        %v1344 = vpop.f32.mrf.mxu0
        %v1345 = vadd.f32 %v1278, %v1344
        %1346 = vdwg.mxu0
        %v1347 = vadd.f32 %v888, %v1343
        %v1348 = vadd.f32 %v889, %v1345
        %1349 = vadd.xlane.f32.xlu0 %v1347
        %v1350 = vpop.xlane.xlu0 %1349
        %1351 = vadd.xlane.f32.xlu0 %v1348
        %v1352 = vpop.xlane.xlu0 %1351
        %v1353 = vrcp.pop 128.0
        %v1354 = vmul.f32 128.0, %v1353
        %v1355 = vsub.f32 1.0, %v1354
        %v1356 = vmul.f32 %v1353, %v1355
        %v1357 = vadd.f32 %v1353, %v1356
        %vm1358 = vweird.f32 %v1353
        %v1359 = vsel %vm1358, %v1353, %v1357
        %v1360 = vmul.f32 %v1350, %v1359
        %v1361 = vmul.f32 %v1352, %v1359
        %v1362 = vsub.f32 %v1347, %v1360
        %v1363 = vsub.f32 %v1348, %v1361
        %v1364 = vmul.f32 %v1362, %v1362
        %v1365 = vmul.f32 %v1363, %v1363
        %1366 = vadd.xlane.f32.xlu0 %v1364
        %v1367 = vpop.xlane.xlu0 %1366
        %1368 = vadd.xlane.f32.xlu0 %v1365
        %v1369 = vpop.xlane.xlu0 %1368
        %v1370 = vmul.f32 %v1367, %v1359
        %v1371 = vmul.f32 %v1369, %v1359
        %v1372 = vadd.f32 %v1370, 1e-05
        %v1373 = vadd.f32 %v1371, 1e-05
        %v1374 = vrsqrt.pop %v1372
        %v1375 = vmul.f32 %v1374, %v1372
        %v1376 = vmul.f32 %v1375, %v1374
        %v1377 = vmul.f32 0.5, %v1376
        %v1378 = vsub.f32 1.5, %v1377
        %v1379 = vmul.f32 %v1374, %v1378
        %vm1380 = vweird.f32 %v1372
        %vm1381 = vweird.f32 %v1374
        %vm1382 = vmor %vm1380, %vm1381
        %v1383 = vsel %vm1382, %v1374, %v1379
        %v1384 = vrsqrt.pop %v1373
        %v1385 = vmul.f32 %v1384, %v1373
        %v1386 = vmul.f32 %v1385, %v1384
        %v1387 = vmul.f32 0.5, %v1386
        %v1388 = vsub.f32 1.5, %v1387
        %v1389 = vmul.f32 %v1384, %v1388
        %vm1390 = vweird.f32 %v1373
        %vm1391 = vweird.f32 %v1384
        %vm1392 = vmor %vm1390, %vm1391
        %v1393 = vsel %vm1392, %v1384, %v1389
        %v1394 = vmul.f32 %v1362, %v1383
        %v1395 = vmul.f32 %v1363, %v1393
        %v1396 = vperm.slane %v887, 1
        %v1397 = vmul.f32 %v1394, %v1396
        %v1398 = vmul.f32 %v1395, %v1396
        %v1399 = vperm.slane %v887, 2
        %v1400 = vadd.f32 %v1397, %v1399
        %v1401 = vadd.f32 %v1398, %v1399
        %v1402 = vpack.c.bf16 %v1401, %v1400
        %v1403 = vld [vmem:[%s648] sm:$0xf]
        %v1404 = vld [vmem:[%s648 + $0x4] sm:$0xf]
        %v1405 = vld [vmem:[%s648 + $0x8] sm:$0xf]
        %v1406 = vld [vmem:[%s648 + $0xc] sm:$0xf]
        %v1407 = vld [vmem:[%s648 + $0x10] sm:$0xf]
        %v1408 = vld [vmem:[%s648 + $0x14] sm:$0xf]
        %v1409 = vld [vmem:[%s648 + $0x18] sm:$0xf]
        %v1410 = vld [vmem:[%s648 + $0x1c] sm:$0xf]
        %v1411 = vld [vmem:[%s648 + $0x20] sm:$0xf]
        %v1412 = vld [vmem:[%s648 + $0x24] sm:$0xf]
        %v1413 = vld [vmem:[%s648 + $0x28] sm:$0xf]
        %v1414 = vld [vmem:[%s648 + $0x2c] sm:$0xf]
        %v1415 = vld [vmem:[%s648 + $0x30] sm:$0xf]
        %v1416 = vld [vmem:[%s648 + $0x34] sm:$0xf]
        %v1417 = vld [vmem:[%s648 + $0x38] sm:$0xf]
        %v1418 = vld [vmem:[%s648 + $0x3c] sm:$0xf]
        %v1419 = vperm.slane %v886, 4
        %v1436 = vunpack.c.l.b16 %v1403
        %v1437 = vunpack.c.l.b16 %v1404
        %v1438 = vunpack.c.l.b16 %v1405
        %v1439 = vunpack.c.l.b16 %v1406
        %v1440 = vunpack.c.l.b16 %v1407
        %v1441 = vunpack.c.l.b16 %v1408
        %v1442 = vunpack.c.l.b16 %v1409
        %v1443 = vunpack.c.l.b16 %v1410
        %v1444 = vunpack.c.l.b16 %v1411
        %v1445 = vunpack.c.l.b16 %v1412
        %v1446 = vunpack.c.l.b16 %v1413
        %v1447 = vunpack.c.l.b16 %v1414
        %v1448 = vunpack.c.l.b16 %v1415
        %v1449 = vunpack.c.l.b16 %v1416
        %v1450 = vunpack.c.l.b16 %v1417
        %v1451 = vunpack.c.l.b16 %v1418
        %v1452 = vpack.c.b16 %v1437, %v1436
        %v1453 = vpack.c.b16 %v1439, %v1438
        %v1454 = vpack.c.b16 %v1441, %v1440
        %v1455 = vpack.c.b16 %v1443, %v1442
        %v1456 = vpack.c.b16 %v1445, %v1444
        %v1457 = vpack.c.b16 %v1447, %v1446
        %v1458 = vpack.c.b16 %v1449, %v1448
        %v1459 = vpack.c.b16 %v1451, %v1450
        %1468 = vmatpush.bf16.msra.mxu0 %v1459
        %1469 = vmatpush.bf16.msra.mxu0 %v1458
        %1470 = vmatpush.bf16.msra.mxu0 %v1457
        %1471 = vmatpush.bf16.msra.mxu0 %v1456
        %1472 = vmatpush.bf16.msra.mxu0 %v1455
        %1473 = vmatpush.bf16.msra.mxu0 %v1454
        %1474 = vmatpush.bf16.msra.mxu0 %v1453
        %1475 = vmatpush.bf16.msra.mxu0 %v1452
        %1476 = vmatmul.bf16.gmra.mxu0 %v1402
        %v1477 = vpop.f32.mrf.mxu0
        %v1478 = vadd.f32 %v1419, %v1477
        %v1479 = vpop.f32.mrf.mxu0
        %v1480 = vadd.f32 %v1419, %v1479
        %1481 = vdwg.mxu0
        %v1482 = vmul.f32 %v1478, 0.125
        %v1483 = vmul.f32 %v1480, 0.125
        %v1484 = vld [vmem:[%s658] sm:$0xff]
        %v1485 = vld [vmem:[%s658 + $0x8] sm:$0xff]
        %v1486 = vld [vmem:[%s658 + $0x10] sm:$0xff]
        %v1487 = vld [vmem:[%s658 + $0x18] sm:$0xff]
        %v1488 = vld [vmem:[%s658 + $0x20] sm:$0xff]
        %v1489 = vld [vmem:[%s658 + $0x28] sm:$0xff]
        %v1490 = vld [vmem:[%s658 + $0x30] sm:$0xff]
        %v1491 = vld [vmem:[%s658 + $0x38] sm:$0xff]
        %v1492 = vld [vmem:[%s658 + $0x40] sm:$0xff]
        %v1493 = vld [vmem:[%s658 + $0x48] sm:$0xff]
        %v1494 = vld [vmem:[%s658 + $0x50] sm:$0xff]
        %v1495 = vld [vmem:[%s658 + $0x58] sm:$0xff]
        %v1496 = vld [vmem:[%s658 + $0x60] sm:$0xff]
        %v1497 = vld [vmem:[%s658 + $0x68] sm:$0xff]
        %v1498 = vld [vmem:[%s658 + $0x70] sm:$0xff]
        %v1499 = vld [vmem:[%s658 + $0x78] sm:$0xff]
        %v1516 = vunpack.c.l.b16 %v1484
        %v1517 = vunpack.c.h.b16 %v1484
        %v1518 = vunpack.c.l.b16 %v1485
        %v1519 = vunpack.c.h.b16 %v1485
        %v1520 = vunpack.c.l.b16 %v1486
        %v1521 = vunpack.c.h.b16 %v1486
        %v1522 = vunpack.c.l.b16 %v1487
        %v1523 = vunpack.c.h.b16 %v1487
        %v1524 = vunpack.c.l.b16 %v1488
        %v1525 = vunpack.c.h.b16 %v1488
        %v1526 = vunpack.c.l.b16 %v1489
        %v1527 = vunpack.c.h.b16 %v1489
        %v1528 = vunpack.c.l.b16 %v1490
        %v1529 = vunpack.c.h.b16 %v1490
        %v1530 = vunpack.c.l.b16 %v1491
        %v1531 = vunpack.c.h.b16 %v1491
        %v1532 = vunpack.c.l.b16 %v1492
        %v1533 = vunpack.c.h.b16 %v1492
        %v1534 = vunpack.c.l.b16 %v1493
        %v1535 = vunpack.c.h.b16 %v1493
        %v1536 = vunpack.c.l.b16 %v1494
        %v1537 = vunpack.c.h.b16 %v1494
        %v1538 = vunpack.c.l.b16 %v1495
        %v1539 = vunpack.c.h.b16 %v1495
        %v1540 = vunpack.c.l.b16 %v1496
        %v1541 = vunpack.c.h.b16 %v1496
        %v1542 = vunpack.c.l.b16 %v1497
        %v1543 = vunpack.c.h.b16 %v1497
        %v1544 = vunpack.c.l.b16 %v1498
        %v1545 = vunpack.c.h.b16 %v1498
        %v1546 = vunpack.c.l.b16 %v1499
        %v1547 = vunpack.c.h.b16 %v1499
        %v1548 = vpack.c.b16 %v1518, %v1516
        %v1549 = vpack.c.b16 %v1519, %v1517
        %v1550 = vpack.c.b16 %v1522, %v1520
        %v1551 = vpack.c.b16 %v1523, %v1521
        %v1552 = vpack.c.b16 %v1526, %v1524
        %v1553 = vpack.c.b16 %v1527, %v1525
        %v1554 = vpack.c.b16 %v1530, %v1528
        %v1555 = vpack.c.b16 %v1531, %v1529
        %v1556 = vpack.c.b16 %v1534, %v1532
        %v1557 = vpack.c.b16 %v1535, %v1533
        %v1558 = vpack.c.b16 %v1538, %v1536
        %v1559 = vpack.c.b16 %v1539, %v1537
        %v1560 = vpack.c.b16 %v1542, %v1540
        %v1561 = vpack.c.b16 %v1543, %v1541
        %v1562 = vpack.c.b16 %v1546, %v1544
        %v1563 = vpack.c.b16 %v1547, %v1545
        %1580 = vmatpush.bf16.msra.mxu0 %v1562
        %1581 = vmatpush.bf16.msra.mxu0 %v1560
        %1582 = vmatpush.bf16.msra.mxu0 %v1558
        %1583 = vmatpush.bf16.msra.mxu0 %v1556
        %1584 = vmatpush.bf16.msra.mxu0 %v1554
        %1585 = vmatpush.bf16.msra.mxu0 %v1552
        %1586 = vmatpush.bf16.msra.mxu0 %v1550
        %1587 = vmatpush.bf16.msra.mxu0 %v1548
        %1588 = vmatmul.bf16.gmra.mxu0 %v892
        %v1589 = vpop.f32.mrf.mxu0
        %v1590 = vadd.f32 0.0, %v1589
        %v1591 = vpop.f32.mrf.mxu0
        %v1592 = vadd.f32 0.0, %v1591
        %1593 = vdwg.mxu0
        %1594 = vmatpush.bf16.msra.mxu0 %v1563
        %1595 = vmatpush.bf16.msra.mxu0 %v1561
        %1596 = vmatpush.bf16.msra.mxu0 %v1559
        %1597 = vmatpush.bf16.msra.mxu0 %v1557
        %1598 = vmatpush.bf16.msra.mxu0 %v1555
        %1599 = vmatpush.bf16.msra.mxu0 %v1553
        %1600 = vmatpush.bf16.msra.mxu0 %v1551
        %1601 = vmatpush.bf16.msra.mxu0 %v1549
        %1602 = vmatmul.bf16.gmra.mxu0 %v892
        %v1603 = vpop.f32.mrf.mxu0
        %v1604 = vadd.f32 0.0, %v1603
        %v1605 = vpop.f32.mrf.mxu0
        %v1606 = vadd.f32 0.0, %v1605
        %1607 = vdwg.mxu0
        %v1608 = vperm.slane %v886, 5
        %v1609 = vadd.f32 %v1590, %v1608
        %v1610 = vadd.f32 %v1592, %v1608
        %v1611 = vperm.slane %v886, 6
        %v1612 = vadd.f32 %v1604, %v1611
        %v1613 = vadd.f32 %v1606, %v1611
        %v1614 = vpack.c.bf16 %v1483, %v1482
        %v1615 = vpack.c.bf16 %v1610, %v1609
        %v1616 = vpack.c.bf16 %v1613, %v1612
        %v1618 = vsel %vm1110, %v1614, 0
        %v1621 = vsel %vm1110, %v1615, 0
        %1623 = vmatpush.bf16.xpose.msra.mxu0 0
        %1624 = vmatpush.bf16.xpose.msra.mxu0 0
        %1625 = vmatpush.bf16.xpose.msra.mxu0 0
        %1626 = vmatpush.bf16.xpose.msra.mxu0 0
        %1627 = vmatpush.bf16.xpose.msra.mxu0 0
        %1628 = vmatpush.bf16.xpose.msra.mxu0 0
        %1629 = vmatpush.bf16.xpose.msra.mxu0 0
        %1630 = vmatpush.bf16.xpose.msra.mxu0 %v1621
        %1631 = vmatmul.bf16.gmra.mxu0 %v1618
        %v1632 = vpop.f32.mrf.mxu0
        %v1633 = vadd.f32 0.0, %v1632
        %v1634 = vpop.f32.mrf.mxu0
        %v1635 = vadd.f32 0.0, %v1634
        %1636 = vdwg.mxu0
        %v1637 = vsel %vm1131, %v1633, -inf
        %1638 = vmax.xlane.f32.xlu0 %v1637
        %v1639 = vpop.xlane.xlu0 %1638
        %v1640 = vsel %vm1131, %v1635, -inf
        %1641 = vmax.xlane.f32.xlu0 %v1640
        %v1642 = vpop.xlane.xlu0 %1641
        %v1643 = vsub.f32 %v1633, %v1639
        %v1644 = vsub.f32 %v1635, %v1642
        %v1645 = vmul.f32 %v1643, 1.442695
        %v1646 = vpow.pop %v1645
        %v1647 = vmul.f32 %v1644, 1.442695
        %v1648 = vpow.pop %v1647
        %v1649 = vsel %vm1131, %v1646, 0.0
        %1650 = vadd.xlane.f32.xlu0 %v1649
        %v1651 = vpop.xlane.xlu0 %1650
        %v1652 = vsel %vm1131, %v1648, 0.0
        %1653 = vadd.xlane.f32.xlu0 %v1652
        %v1654 = vpop.xlane.xlu0 %1653
        %v1655 = vrcp.pop %v1651
        %v1656 = vrcp.pop %v1654
        %v1657 = vmul.f32 %v1646, %v1655
        %v1658 = vmul.f32 %v1648, %v1656
        %v1659 = vpack.c.bf16 %v1658, %v1657
        %v1661 = vsel %vm1131, %v1659, 0
        %1663 = vmatpush.bf16.msra.mxu0 0
        %1664 = vmatpush.bf16.msra.mxu0 0
        %1665 = vmatpush.bf16.msra.mxu0 0
        %1666 = vmatpush.bf16.msra.mxu0 0
        %1667 = vmatpush.bf16.msra.mxu0 0
        %1668 = vmatpush.bf16.msra.mxu0 0
        %1669 = vmatpush.bf16.msra.mxu0 0
        %1670 = vmatpush.bf16.msra.mxu0 %v1616
        %1671 = vmatmul.bf16.gmra.mxu0 %v1661
        %v1672 = vpop.f32.mrf.mxu0
        %v1673 = vadd.f32 0.0, %v1672
        %v1674 = vpop.f32.mrf.mxu0
        %v1675 = vadd.f32 0.0, %v1674
        %1676 = vdwg.mxu0
        %v1677 = vpack.c.bf16 %v1673, %v1673
        %v1678 = vpack.c.bf16 %v1675, %v1675
        %1679 = vst.msk [vmem:[#allocation4] sm:$0xf] %vm1174, %v1677
        %1680 = vst.msk [vmem:[#allocation4 + $0x4] sm:$0xf] %vm1174, %v1678
        %1682 = vrot.lane.b32.xlu0 %v1614, 64
        %v1683 = vpop.permute.xlu0 %1682
        %1685 = vrot.lane.b32.xlu0 %v1615, 64
        %v1686 = vpop.permute.xlu0 %1685
        %v1688 = vsel %vm1110, %v1683, 0
        %v1691 = vsel %vm1110, %v1686, 0
        %1693 = vmatpush.bf16.xpose.msra.mxu0 0
        %1694 = vmatpush.bf16.xpose.msra.mxu0 0
        %1695 = vmatpush.bf16.xpose.msra.mxu0 0
        %1696 = vmatpush.bf16.xpose.msra.mxu0 0
        %1697 = vmatpush.bf16.xpose.msra.mxu0 0
        %1698 = vmatpush.bf16.xpose.msra.mxu0 0
        %1699 = vmatpush.bf16.xpose.msra.mxu0 0
        %1700 = vmatpush.bf16.xpose.msra.mxu0 %v1691
        %1701 = vmatmul.bf16.gmra.mxu0 %v1688
        %v1702 = vpop.f32.mrf.mxu0
        %v1703 = vadd.f32 0.0, %v1702
        %v1704 = vpop.f32.mrf.mxu0
        %v1705 = vadd.f32 0.0, %v1704
        %1706 = vdwg.mxu0
        %v1707 = vsel %vm1131, %v1703, -inf
        %1708 = vmax.xlane.f32.xlu0 %v1707
        %v1709 = vpop.xlane.xlu0 %1708
        %v1710 = vsel %vm1131, %v1705, -inf
        %1711 = vmax.xlane.f32.xlu0 %v1710
        %v1712 = vpop.xlane.xlu0 %1711
        %v1713 = vsub.f32 %v1703, %v1709
        %v1714 = vsub.f32 %v1705, %v1712
        %v1715 = vmul.f32 %v1713, 1.442695
        %v1716 = vpow.pop %v1715
        %v1717 = vmul.f32 %v1714, 1.442695
        %v1718 = vpow.pop %v1717
        %v1719 = vsel %vm1131, %v1716, 0.0
        %1720 = vadd.xlane.f32.xlu0 %v1719
        %v1721 = vpop.xlane.xlu0 %1720
        %v1722 = vsel %vm1131, %v1718, 0.0
        %1723 = vadd.xlane.f32.xlu0 %v1722
        %v1724 = vpop.xlane.xlu0 %1723
        %v1725 = vrcp.pop %v1721
        %v1726 = vrcp.pop %v1724
        %v1727 = vmul.f32 %v1716, %v1725
        %v1728 = vmul.f32 %v1718, %v1726
        %v1729 = vpack.c.bf16 %v1728, %v1727
        %1731 = vrot.lane.b32.xlu0 %v1616, 64
        %v1732 = vpop.permute.xlu0 %1731
        %v1735 = vsel %vm1131, %v1729, 0
        %1737 = vmatpush.bf16.msra.mxu0 0
        %1738 = vmatpush.bf16.msra.mxu0 0
        %1739 = vmatpush.bf16.msra.mxu0 0
        %1740 = vmatpush.bf16.msra.mxu0 0
        %1741 = vmatpush.bf16.msra.mxu0 0
        %1742 = vmatpush.bf16.msra.mxu0 0
        %1743 = vmatpush.bf16.msra.mxu0 0
        %1744 = vmatpush.bf16.msra.mxu0 %v1732
        %1745 = vmatmul.bf16.gmra.mxu0 %v1735
        %v1746 = vpop.f32.mrf.mxu0
        %v1747 = vadd.f32 0.0, %v1746
        %v1748 = vpop.f32.mrf.mxu0
        %v1749 = vadd.f32 0.0, %v1748
        %1750 = vdwg.mxu0
        %v1751 = vpack.c.bf16 %v1747, %v1747
        %v1752 = vpack.c.bf16 %v1749, %v1749
        %1755 = vrot.lane.b32.xlu0 %v1751, 64
        %v1756 = vpop.permute.xlu0 %1755
        %1757 = vrot.lane.b32.xlu0 %v1752, 64
        %v1758 = vpop.permute.xlu0 %1757
        %1761 = vst.msk [vmem:[#allocation4] sm:$0xf] %vm1257, %v1756
        %1762 = vst.msk [vmem:[#allocation4 + $0x4] sm:$0xf] %vm1257, %v1758
        %v1763 = vld [vmem:[#allocation4] sm:$0xf]
        %v1764 = vld [vmem:[#allocation4 + $0x4] sm:$0xf]
        %v1765 = vld [vmem:[%s668] sm:$0xf]
        %v1766 = vld [vmem:[%s668 + $0x4] sm:$0xf]
        %v1767 = vld [vmem:[%s668 + $0x8] sm:$0xf]
        %v1768 = vld [vmem:[%s668 + $0xc] sm:$0xf]
        %v1769 = vld [vmem:[%s668 + $0x10] sm:$0xf]
        %v1770 = vld [vmem:[%s668 + $0x14] sm:$0xf]
        %v1771 = vld [vmem:[%s668 + $0x18] sm:$0xf]
        %v1772 = vld [vmem:[%s668 + $0x1c] sm:$0xf]
        %v1773 = vld [vmem:[%s668 + $0x20] sm:$0xf]
        %v1774 = vld [vmem:[%s668 + $0x24] sm:$0xf]
        %v1775 = vld [vmem:[%s668 + $0x28] sm:$0xf]
        %v1776 = vld [vmem:[%s668 + $0x2c] sm:$0xf]
        %v1777 = vld [vmem:[%s668 + $0x30] sm:$0xf]
        %v1778 = vld [vmem:[%s668 + $0x34] sm:$0xf]
        %v1779 = vld [vmem:[%s668 + $0x38] sm:$0xf]
        %v1780 = vld [vmem:[%s668 + $0x3c] sm:$0xf]
        %v1781 = vperm.slane %v886, 7
        %v1784 = vunpack.c.l.b16 %v1763
        %v1785 = vunpack.c.l.b16 %v1764
        %v1786 = vpack.c.b16 %v1785, %v1784
        %v1804 = vunpack.c.l.b16 %v1765
        %v1805 = vunpack.c.l.b16 %v1766
        %v1806 = vunpack.c.l.b16 %v1767
        %v1807 = vunpack.c.l.b16 %v1768
        %v1808 = vunpack.c.l.b16 %v1769
        %v1809 = vunpack.c.l.b16 %v1770
        %v1810 = vunpack.c.l.b16 %v1771
        %v1811 = vunpack.c.l.b16 %v1772
        %v1812 = vunpack.c.l.b16 %v1773
        %v1813 = vunpack.c.l.b16 %v1774
        %v1814 = vunpack.c.l.b16 %v1775
        %v1815 = vunpack.c.l.b16 %v1776
        %v1816 = vunpack.c.l.b16 %v1777
        %v1817 = vunpack.c.l.b16 %v1778
        %v1818 = vunpack.c.l.b16 %v1779
        %v1819 = vunpack.c.l.b16 %v1780
        %v1820 = vpack.c.b16 %v1805, %v1804
        %v1821 = vpack.c.b16 %v1807, %v1806
        %v1822 = vpack.c.b16 %v1809, %v1808
        %v1823 = vpack.c.b16 %v1811, %v1810
        %v1824 = vpack.c.b16 %v1813, %v1812
        %v1825 = vpack.c.b16 %v1815, %v1814
        %v1826 = vpack.c.b16 %v1817, %v1816
        %v1827 = vpack.c.b16 %v1819, %v1818
        %1836 = vmatpush.bf16.msra.mxu0 %v1827
        %1837 = vmatpush.bf16.msra.mxu0 %v1826
        %1838 = vmatpush.bf16.msra.mxu0 %v1825
        %1839 = vmatpush.bf16.msra.mxu0 %v1824
        %1840 = vmatpush.bf16.msra.mxu0 %v1823
        %1841 = vmatpush.bf16.msra.mxu0 %v1822
        %1842 = vmatpush.bf16.msra.mxu0 %v1821
        %1843 = vmatpush.bf16.msra.mxu0 %v1820
        %1844 = vmatmul.bf16.gmra.mxu0 %v1786
        %v1845 = vpop.f32.mrf.mxu0
        %v1846 = vadd.f32 %v1781, %v1845
        %v1847 = vpop.f32.mrf.mxu0
        %v1848 = vadd.f32 %v1781, %v1847
        %1849 = vdwg.mxu0
        %v1850 = vadd.f32 %v1400, %v1846
        %v1851 = vadd.f32 %v1401, %v1848
        %1852 = vadd.xlane.f32.xlu0 %v1850
        %v1853 = vpop.xlane.xlu0 %1852
        %1854 = vadd.xlane.f32.xlu0 %v1851
        %v1855 = vpop.xlane.xlu0 %1854
        %v1856 = vmul.f32 %v1853, %v1359
        %v1857 = vmul.f32 %v1855, %v1359
        %v1858 = vsub.f32 %v1850, %v1856
        %v1859 = vsub.f32 %v1851, %v1857
        %v1860 = vmul.f32 %v1858, %v1858
        %v1861 = vmul.f32 %v1859, %v1859
        %1862 = vadd.xlane.f32.xlu0 %v1860
        %v1863 = vpop.xlane.xlu0 %1862
        %1864 = vadd.xlane.f32.xlu0 %v1861
        %v1865 = vpop.xlane.xlu0 %1864
        %v1866 = vmul.f32 %v1863, %v1359
        %v1867 = vmul.f32 %v1865, %v1359
        %v1868 = vadd.f32 %v1866, 1e-05
        %v1869 = vadd.f32 %v1867, 1e-05
        %v1870 = vrsqrt.pop %v1868
        %v1871 = vmul.f32 %v1870, %v1868
        %v1872 = vmul.f32 %v1871, %v1870
        %v1873 = vmul.f32 0.5, %v1872
        %v1874 = vsub.f32 1.5, %v1873
        %v1875 = vmul.f32 %v1870, %v1874
        %vm1876 = vweird.f32 %v1868
        %vm1877 = vweird.f32 %v1870
        %vm1878 = vmor %vm1876, %vm1877
        %v1879 = vsel %vm1878, %v1870, %v1875
        %v1880 = vrsqrt.pop %v1869
        %v1881 = vmul.f32 %v1880, %v1869
        %v1882 = vmul.f32 %v1881, %v1880
        %v1883 = vmul.f32 0.5, %v1882
        %v1884 = vsub.f32 1.5, %v1883
        %v1885 = vmul.f32 %v1880, %v1884
        %vm1886 = vweird.f32 %v1869
        %vm1887 = vweird.f32 %v1880
        %vm1888 = vmor %vm1886, %vm1887
        %v1889 = vsel %vm1888, %v1880, %v1885
        %v1890 = vmul.f32 %v1858, %v1879
        %v1891 = vmul.f32 %v1859, %v1889
        %v1892 = vperm.slane %v887, 3
        %v1893 = vmul.f32 %v1890, %v1892
        %v1894 = vmul.f32 %v1891, %v1892
        %v1895 = vperm.slane %v887, 4
        %v1896 = vadd.f32 %v1893, %v1895
        %v1897 = vadd.f32 %v1894, %v1895
        %v1898 = vpack.c.bf16 %v1897, %v1896
        %v1899 = vld [vmem:[%s678] sm:$0xff]
        %v1900 = vld [vmem:[%s678 + $0x8] sm:$0xff]
        %v1901 = vld [vmem:[%s678 + $0x10] sm:$0xff]
        %v1902 = vld [vmem:[%s678 + $0x18] sm:$0xff]
        %v1903 = vld [vmem:[%s678 + $0x20] sm:$0xff]
        %v1904 = vld [vmem:[%s678 + $0x28] sm:$0xff]
        %v1905 = vld [vmem:[%s678 + $0x30] sm:$0xff]
        %v1906 = vld [vmem:[%s678 + $0x38] sm:$0xff]
        %v1907 = vld [vmem:[%s678 + $0x40] sm:$0xff]
        %v1908 = vld [vmem:[%s678 + $0x48] sm:$0xff]
        %v1909 = vld [vmem:[%s678 + $0x50] sm:$0xff]
        %v1910 = vld [vmem:[%s678 + $0x58] sm:$0xff]
        %v1911 = vld [vmem:[%s678 + $0x60] sm:$0xff]
        %v1912 = vld [vmem:[%s678 + $0x68] sm:$0xff]
        %v1913 = vld [vmem:[%s678 + $0x70] sm:$0xff]
        %v1914 = vld [vmem:[%s678 + $0x78] sm:$0xff]
        %v1915 = vld [vmem:[%s789] sm:$0x3]
        %v1917 = vperm.slane %v1915, 0
        %v1918 = vperm.slane %v1915, 1
        %v1937 = vunpack.c.l.b16 %v1899
        %v1938 = vunpack.c.h.b16 %v1899
        %v1939 = vunpack.c.l.b16 %v1900
        %v1940 = vunpack.c.h.b16 %v1900
        %v1941 = vunpack.c.l.b16 %v1901
        %v1942 = vunpack.c.h.b16 %v1901
        %v1943 = vunpack.c.l.b16 %v1902
        %v1944 = vunpack.c.h.b16 %v1902
        %v1945 = vunpack.c.l.b16 %v1903
        %v1946 = vunpack.c.h.b16 %v1903
        %v1947 = vunpack.c.l.b16 %v1904
        %v1948 = vunpack.c.h.b16 %v1904
        %v1949 = vunpack.c.l.b16 %v1905
        %v1950 = vunpack.c.h.b16 %v1905
        %v1951 = vunpack.c.l.b16 %v1906
        %v1952 = vunpack.c.h.b16 %v1906
        %v1953 = vunpack.c.l.b16 %v1907
        %v1954 = vunpack.c.h.b16 %v1907
        %v1955 = vunpack.c.l.b16 %v1908
        %v1956 = vunpack.c.h.b16 %v1908
        %v1957 = vunpack.c.l.b16 %v1909
        %v1958 = vunpack.c.h.b16 %v1909
        %v1959 = vunpack.c.l.b16 %v1910
        %v1960 = vunpack.c.h.b16 %v1910
        %v1961 = vunpack.c.l.b16 %v1911
        %v1962 = vunpack.c.h.b16 %v1911
        %v1963 = vunpack.c.l.b16 %v1912
        %v1964 = vunpack.c.h.b16 %v1912
        %v1965 = vunpack.c.l.b16 %v1913
        %v1966 = vunpack.c.h.b16 %v1913
        %v1967 = vunpack.c.l.b16 %v1914
        %v1968 = vunpack.c.h.b16 %v1914
        %v1969 = vpack.c.b16 %v1939, %v1937
        %v1970 = vpack.c.b16 %v1940, %v1938
        %v1971 = vpack.c.b16 %v1943, %v1941
        %v1972 = vpack.c.b16 %v1944, %v1942
        %v1973 = vpack.c.b16 %v1947, %v1945
        %v1974 = vpack.c.b16 %v1948, %v1946
        %v1975 = vpack.c.b16 %v1951, %v1949
        %v1976 = vpack.c.b16 %v1952, %v1950
        %v1977 = vpack.c.b16 %v1955, %v1953
        %v1978 = vpack.c.b16 %v1956, %v1954
        %v1979 = vpack.c.b16 %v1959, %v1957
        %v1980 = vpack.c.b16 %v1960, %v1958
        %v1981 = vpack.c.b16 %v1963, %v1961
        %v1982 = vpack.c.b16 %v1964, %v1962
        %v1983 = vpack.c.b16 %v1967, %v1965
        %v1984 = vpack.c.b16 %v1968, %v1966
        %2001 = vmatpush.bf16.msra.mxu0 %v1983
        %2002 = vmatpush.bf16.msra.mxu0 %v1981
        %2003 = vmatpush.bf16.msra.mxu0 %v1979
        %2004 = vmatpush.bf16.msra.mxu0 %v1977
        %2005 = vmatpush.bf16.msra.mxu0 %v1975
        %2006 = vmatpush.bf16.msra.mxu0 %v1973
        %2007 = vmatpush.bf16.msra.mxu0 %v1971
        %2008 = vmatpush.bf16.msra.mxu0 %v1969
        %2009 = vmatmul.bf16.gmra.mxu0 %v1898
        %v2010 = vpop.f32.mrf.mxu0
        %v2011 = vadd.f32 %v1917, %v2010
        %v2012 = vpop.f32.mrf.mxu0
        %v2013 = vadd.f32 %v1917, %v2012
        %2014 = vdwg.mxu0
        %2015 = vmatpush.bf16.msra.mxu0 %v1984
        %2016 = vmatpush.bf16.msra.mxu0 %v1982
        %2017 = vmatpush.bf16.msra.mxu0 %v1980
        %2018 = vmatpush.bf16.msra.mxu0 %v1978
        %2019 = vmatpush.bf16.msra.mxu0 %v1976
        %2020 = vmatpush.bf16.msra.mxu0 %v1974
        %2021 = vmatpush.bf16.msra.mxu0 %v1972
        %2022 = vmatpush.bf16.msra.mxu0 %v1970
        %2023 = vmatmul.bf16.gmra.mxu0 %v1898
        %v2024 = vpop.f32.mrf.mxu0
        %v2025 = vadd.f32 %v1918, %v2024
        %v2026 = vpop.f32.mrf.mxu0
        %v2027 = vadd.f32 %v1918, %v2026
        %2028 = vdwg.mxu0
        %v2029 = vmax.f32 %v2011, 0.0
        %v2030 = vmax.f32 %v2025, 0.0
        %v2031 = vmax.f32 %v2013, 0.0
        %v2032 = vmax.f32 %v2027, 0.0
        %v2033 = vpack.c.bf16 %v2031, %v2029
        %v2034 = vpack.c.bf16 %v2032, %v2030
        %v2035 = vld [vmem:[%s688] sm:$0xf]
        %v2036 = vld [vmem:[%s688 + $0x4] sm:$0xf]
        %v2037 = vld [vmem:[%s688 + $0x8] sm:$0xf]
        %v2038 = vld [vmem:[%s688 + $0xc] sm:$0xf]
        %v2039 = vld [vmem:[%s688 + $0x10] sm:$0xf]
        %v2040 = vld [vmem:[%s688 + $0x14] sm:$0xf]
        %v2041 = vld [vmem:[%s688 + $0x18] sm:$0xf]
        %v2042 = vld [vmem:[%s688 + $0x1c] sm:$0xf]
        %v2043 = vld [vmem:[%s688 + $0x20] sm:$0xf]
        %v2044 = vld [vmem:[%s688 + $0x24] sm:$0xf]
        %v2045 = vld [vmem:[%s688 + $0x28] sm:$0xf]
        %v2046 = vld [vmem:[%s688 + $0x2c] sm:$0xf]
        %v2047 = vld [vmem:[%s688 + $0x30] sm:$0xf]
        %v2048 = vld [vmem:[%s688 + $0x34] sm:$0xf]
        %v2049 = vld [vmem:[%s688 + $0x38] sm:$0xf]
        %v2050 = vld [vmem:[%s688 + $0x3c] sm:$0xf]
        %v2051 = vld [vmem:[%s688 + $0x40] sm:$0xf]
        %v2052 = vld [vmem:[%s688 + $0x44] sm:$0xf]
        %v2053 = vld [vmem:[%s688 + $0x48] sm:$0xf]
        %v2054 = vld [vmem:[%s688 + $0x4c] sm:$0xf]
        %v2055 = vld [vmem:[%s688 + $0x50] sm:$0xf]
        %v2056 = vld [vmem:[%s688 + $0x54] sm:$0xf]
        %v2057 = vld [vmem:[%s688 + $0x58] sm:$0xf]
        %v2058 = vld [vmem:[%s688 + $0x5c] sm:$0xf]
        %v2059 = vld [vmem:[%s688 + $0x60] sm:$0xf]
        %v2060 = vld [vmem:[%s688 + $0x64] sm:$0xf]
        %v2061 = vld [vmem:[%s688 + $0x68] sm:$0xf]
        %v2062 = vld [vmem:[%s688 + $0x6c] sm:$0xf]
        %v2063 = vld [vmem:[%s688 + $0x70] sm:$0xf]
        %v2064 = vld [vmem:[%s688 + $0x74] sm:$0xf]
        %v2065 = vld [vmem:[%s688 + $0x78] sm:$0xf]
        %v2066 = vld [vmem:[%s688 + $0x7c] sm:$0xf]
        %v2067 = vperm.slane %v887, 0
        %v2100 = vunpack.c.l.b16 %v2035
        %v2101 = vunpack.c.l.b16 %v2036
        %v2102 = vunpack.c.l.b16 %v2037
        %v2103 = vunpack.c.l.b16 %v2038
        %v2104 = vunpack.c.l.b16 %v2039
        %v2105 = vunpack.c.l.b16 %v2040
        %v2106 = vunpack.c.l.b16 %v2041
        %v2107 = vunpack.c.l.b16 %v2042
        %v2108 = vunpack.c.l.b16 %v2043
        %v2109 = vunpack.c.l.b16 %v2044
        %v2110 = vunpack.c.l.b16 %v2045
        %v2111 = vunpack.c.l.b16 %v2046
        %v2112 = vunpack.c.l.b16 %v2047
        %v2113 = vunpack.c.l.b16 %v2048
        %v2114 = vunpack.c.l.b16 %v2049
        %v2115 = vunpack.c.l.b16 %v2050
        %v2116 = vunpack.c.l.b16 %v2051
        %v2117 = vunpack.c.l.b16 %v2052
        %v2118 = vunpack.c.l.b16 %v2053
        %v2119 = vunpack.c.l.b16 %v2054
        %v2120 = vunpack.c.l.b16 %v2055
        %v2121 = vunpack.c.l.b16 %v2056
        %v2122 = vunpack.c.l.b16 %v2057
        %v2123 = vunpack.c.l.b16 %v2058
        %v2124 = vunpack.c.l.b16 %v2059
        %v2125 = vunpack.c.l.b16 %v2060
        %v2126 = vunpack.c.l.b16 %v2061
        %v2127 = vunpack.c.l.b16 %v2062
        %v2128 = vunpack.c.l.b16 %v2063
        %v2129 = vunpack.c.l.b16 %v2064
        %v2130 = vunpack.c.l.b16 %v2065
        %v2131 = vunpack.c.l.b16 %v2066
        %v2132 = vpack.c.b16 %v2101, %v2100
        %v2133 = vpack.c.b16 %v2103, %v2102
        %v2134 = vpack.c.b16 %v2105, %v2104
        %v2135 = vpack.c.b16 %v2107, %v2106
        %v2136 = vpack.c.b16 %v2109, %v2108
        %v2137 = vpack.c.b16 %v2111, %v2110
        %v2138 = vpack.c.b16 %v2113, %v2112
        %v2139 = vpack.c.b16 %v2115, %v2114
        %v2140 = vpack.c.b16 %v2117, %v2116
        %v2141 = vpack.c.b16 %v2119, %v2118
        %v2142 = vpack.c.b16 %v2121, %v2120
        %v2143 = vpack.c.b16 %v2123, %v2122
        %v2144 = vpack.c.b16 %v2125, %v2124
        %v2145 = vpack.c.b16 %v2127, %v2126
        %v2146 = vpack.c.b16 %v2129, %v2128
        %v2147 = vpack.c.b16 %v2131, %v2130
        %2164 = vmatpush.bf16.msra.mxu0 %v2139
        %2165 = vmatpush.bf16.msra.mxu0 %v2138
        %2166 = vmatpush.bf16.msra.mxu0 %v2137
        %2167 = vmatpush.bf16.msra.mxu0 %v2136
        %2168 = vmatpush.bf16.msra.mxu0 %v2135
        %2169 = vmatpush.bf16.msra.mxu0 %v2134
        %2170 = vmatpush.bf16.msra.mxu0 %v2133
        %2171 = vmatpush.bf16.msra.mxu0 %v2132
        %2172 = vmatmul.bf16.gmra.mxu0 %v2033
        %v2173 = vpop.f32.mrf.mxu0
        %v2174 = vadd.f32 %v2067, %v2173
        %v2175 = vpop.f32.mrf.mxu0
        %v2176 = vadd.f32 %v2067, %v2175
        %2177 = vdwg.mxu0
        %2178 = vmatpush.bf16.msra.mxu0 %v2147
        %2179 = vmatpush.bf16.msra.mxu0 %v2146
        %2180 = vmatpush.bf16.msra.mxu0 %v2145
        %2181 = vmatpush.bf16.msra.mxu0 %v2144
        %2182 = vmatpush.bf16.msra.mxu0 %v2143
        %2183 = vmatpush.bf16.msra.mxu0 %v2142
        %2184 = vmatpush.bf16.msra.mxu0 %v2141
        %2185 = vmatpush.bf16.msra.mxu0 %v2140
        %2186 = vmatmul.bf16.gmra.mxu0 %v2034
        %v2187 = vpop.f32.mrf.mxu0
        %v2188 = vadd.f32 %v2174, %v2187
        %v2189 = vpop.f32.mrf.mxu0
        %v2190 = vadd.f32 %v2176, %v2189
        %2191 = vdwg.mxu0
        %v2192 = vadd.f32 %v1896, %v2188
        %v2193 = vadd.f32 %v1897, %v2190
        %2194 = vadd.xlane.f32.xlu0 %v2192
        %v2195 = vpop.xlane.xlu0 %2194
        %2196 = vadd.xlane.f32.xlu0 %v2193
        %v2197 = vpop.xlane.xlu0 %2196
        %v2198 = vmul.f32 %v2195, %v1359
        %v2199 = vmul.f32 %v2197, %v1359
        %v2200 = vsub.f32 %v2192, %v2198
        %v2201 = vsub.f32 %v2193, %v2199
        %v2202 = vmul.f32 %v2200, %v2200
        %v2203 = vmul.f32 %v2201, %v2201
        %2204 = vadd.xlane.f32.xlu0 %v2202
        %v2205 = vpop.xlane.xlu0 %2204
        %2206 = vadd.xlane.f32.xlu0 %v2203
        %v2207 = vpop.xlane.xlu0 %2206
        %v2208 = vmul.f32 %v2205, %v1359
        %v2209 = vmul.f32 %v2207, %v1359
        %v2210 = vadd.f32 %v2208, 1e-05
        %v2211 = vadd.f32 %v2209, 1e-05
        %v2212 = vrsqrt.pop %v2210
        %v2213 = vmul.f32 %v2212, %v2210
        %v2214 = vmul.f32 %v2213, %v2212
        %v2215 = vmul.f32 0.5, %v2214
        %v2216 = vsub.f32 1.5, %v2215
        %v2217 = vmul.f32 %v2212, %v2216
        %vm2218 = vweird.f32 %v2210
        %vm2219 = vweird.f32 %v2212
        %vm2220 = vmor %vm2218, %vm2219
        %v2221 = vsel %vm2220, %v2212, %v2217
        %v2222 = vrsqrt.pop %v2211
        %v2223 = vmul.f32 %v2222, %v2211
        %v2224 = vmul.f32 %v2223, %v2222
        %v2225 = vmul.f32 0.5, %v2224
        %v2226 = vsub.f32 1.5, %v2225
        %v2227 = vmul.f32 %v2222, %v2226
        %vm2228 = vweird.f32 %v2211
        %vm2229 = vweird.f32 %v2222
        %vm2230 = vmor %vm2228, %vm2229
        %v2231 = vsel %vm2230, %v2222, %v2227
        %v2232 = vmul.f32 %v2200, %v2221
        %v2233 = vmul.f32 %v2201, %v2231
        %v2234 = vperm.slane %v887, 5
        %v2235 = vmul.f32 %v2232, %v2234
        %v2236 = vmul.f32 %v2233, %v2234
        %v2237 = vperm.slane %v887, 6
        %v2238 = vadd.f32 %v2235, %v2237
        %v2239 = vadd.f32 %v2236, %v2237
        %2240 = vst [vmem:[#allocation3] sm:$0xff] %v2238
        %2241 = vst [vmem:[#allocation3 + $0x8] sm:$0xff] %v2239
        %p2242 = scmp.eq.s32.totalorder %s45, 1
        // Predicated region
        $region109: #{tpu_custom_call.1} parent=71 // pred_check
          %p2243 = pneg %p2242
        $region110: #{tpu_custom_call.1} parent=71 // pred_check_branch
          %2245 = sbr.rel (%p2243) target = $region112
        $region111: #{tpu_custom_call.1} parent=71 // pred_region
          %2246 = vst [vmem:[%s775] sm:$0xff] %v2238
          %2247 = vst [vmem:[%s775 + $0x8] sm:$0xff] %v2239
        $region112: #{tpu_custom_call.1} parent=71 // pred_fallthru
          _
        %s2248 = sand.u32 %s383, 1
        %s2249 = scalar_lea.sflag [#allocation7], %s2248
        %s2250 = sand.u32 %s383, 1
        %s2251 = smul.addr %s2250, 16
        %s2252 = scalar_lea.vmem [#allocation19], %s2251
        // Predicated region
        $region113: #{tpu_custom_call.1} parent=71 // pred_check
          %p2253 = pneg %p393
        $region114: #{tpu_custom_call.1} parent=71 // pred_check_branch
          %2255 = sbr.rel (%p2253) target = $region116
        $region115: #{tpu_custom_call.1} parent=71 // pred_region
          %2257 = vsyncadd %s2249, 0
          %s2258 = smul.addr %s44, 2
          %s2259 = smul.addr %s2258, 8
          %s2260 = scalar_lea.hbm %s13, %s2259
          %s2261 = sshll.u32 %s2252, 4
          %s2262 = int_to_ptr.vmem [resolvable:$true] %s2261
          %s2263 = sshll.u32 %s2260, 4
          %s2264 = int_to_ptr.hbm [resolvable:$true] %s2263
          %2269 = dma.vmem_to_hbm [thread:$0]  %s2262, 256, %s2264, %s2249, 128, 128, 8
        $region116: #{tpu_custom_call.1} parent=71 // pred_fallthru
          _
      $region72: #{tpu_custom_call.1} parent=5 // pred_fallthru
        _
      %p2270 = scmp.le.s32.totalorder 2, %s35
      // Predicated region
      $region117: #{tpu_custom_call.1} parent=5 // pred_check
        %p2271 = pneg %p2270
      $region118: #{tpu_custom_call.1} parent=5 // pred_check_branch
        %2273 = sbr.rel (%p2271) target = $region120
      $region119: #{tpu_custom_call.1} parent=5 // pred_region
        %s2274 = ssub.s32 %s35, 2
        // Predicated region
        $region121: #{tpu_custom_call.1} parent=119 // pred_check
          %p2275 = pneg %p399
        $region122: #{tpu_custom_call.1} parent=119 // pred_check_branch
          %2277 = sbr.rel (%p2275) target = $region124
        $region123: #{tpu_custom_call.1} parent=119 // pred_region
          %s2278 = sand.u32 %s384, 1
          %s2279 = scalar_lea.sflag [#allocation7], %s2278
          %s2280 = sand.u32 %s384, 1
          %s2281 = smul.addr %s2280, 16
          %s2282 = scalar_lea.vmem [#allocation19], %s2281
          %2284 = dma.done %s2279, 256
        $region124: #{tpu_custom_call.1} parent=119 // pred_fallthru
          _
      $region120: #{tpu_custom_call.1} parent=5 // pred_fallthru
        _
    $region6: #{tpu_custom_call.1} parent=1 // loop_footer
      %s39 = sadd.s32 1, %s35
    $region7: #{tpu_custom_call.1} parent=1 // loop_footer_branch
      %34 = sbr.rel target = $region3
    $region8: #{tpu_custom_call.1} parent=1 // loop_exit
      _
    %2285 = vsyncpa [#allocation6], 1
    %s2286 = scalar_lea.sflag [#allocation6], 1
    %2287 = vsyncpa %s2286, 1
    %2288 = vsyncpa [#allocation9], 1
    %s2289 = scalar_lea.sflag [#allocation9], 1
    %2290 = vsyncpa %s2289, 1
    %2291 = vsyncpa [#allocation12], 1
    %s2292 = scalar_lea.sflag [#allocation12], 1
    %2293 = vsyncpa %s2292, 1
    %2294 = vsyncpa [#allocation15], 1
    %s2295 = scalar_lea.sflag [#allocation15], 1
    %2296 = vsyncpa %s2295, 1
    %2297 = vsyncpa [#allocation18], 1
    %s2298 = scalar_lea.sflag [#allocation18], 1
    %2299 = vsyncpa %s2298, 1
    %2300 = vsyncpa [#allocation7], 1
    %s2301 = scalar_lea.sflag [#allocation7], 1
    %2302 = vsyncpa %s2301, 1

</llo_original>
